<compile_context>
chip_gen: v5e
topology: v5e:2x2
jax: 0.10.0
libtpu: 0.0.40
codegen_flags: <defaults>
</compile_context>

<pallas_src>
import functools

import jax
import jax.numpy as jnp
from jax.experimental import pallas as pl
from jax.experimental.pallas import tpu as pltpu


def _round_up(x, m):
    return (x + m - 1) // m * m


def _pick_vmem_limit():
    cap = 64 * 1024 * 1024
    try:
        info = pltpu.get_tpu_info()
        cap = int(getattr(info, "vmem_capacity_bytes", cap))
    except Exception:
        pass
    # Leave headroom; cap well under physical VMEM on every generation.
    return min(cap * 3 // 4, 96 * 1024 * 1024)


_VMEM_LIMIT = _pick_vmem_limit()


# ----------------------------------------------------------------------------
# Pallas kernel: out = maybe_relu(x @ w + b), f32 accumulation on the MXU.
# ----------------------------------------------------------------------------
def _gemm_bias_kernel(x_ref, w_ref, b_ref, o_ref, *, relu: bool):
    acc = jnp.dot(x_ref[...], w_ref[...], preferred_element_type=jnp.float32)
    acc = acc + b_ref[...]                       # (1, N) broadcasts over rows
    if relu:
        acc = jnp.maximum(acc, 0.0)
    o_ref[...] = acc.astype(o_ref.dtype)


def grouped_matmul_bias(x, w, b, n_out, *, relu, out_dtype, tm=1024):
    """Batched-by-group GEMM:  out[g] = maybe_relu(x[g] @ w[g] + b[g]).

    x: [G, M, K] (any float; cast to bf16),  w: [G, Kp, Np] bf16 (pre-padded),
    b: [G, 1, Np] f32 (pre-padded).  Returns [G, M, n_out] in `out_dtype`.
    The group axis G is a leading "parallel" grid axis (branch sharding on
    v7x's two TensorCores); M is tiled with `tm`-row tiles; weights/bias stay
    VMEM-resident across the row tiles of a group.
    """
    G, M, K = x.shape
    Gw, Kp, Np = w.shape
    assert Gw == G and b.shape == (G, 1, Np) and K <= Kp and n_out <= Np

    if M <= tm:
        tile_m = _round_up(M, 16)                # 16 rows: bf16 sublane packing
        Mp, grid_m = tile_m, 1
    else:
        tile_m = tm
        Mp = _round_up(M, tm)
        grid_m = Mp // tm

    if (Mp, Kp) != (M, K):
        x = jnp.pad(x, ((0, 0), (0, Mp - M), (0, Kp - K)))
    x = x.astype(jnp.bfloat16)

    kern = functools.partial(_gemm_bias_kernel, relu=relu)
    out_bytes = Mp * Np * jnp.dtype(out_dtype).itemsize
    cost = pl.CostEstimate(
        flops=2 * G * Mp * Np * Kp,
        transcendentals=0,
        bytes_accessed=G * (2 * (Mp * Kp + Kp * Np) + 4 * Np + out_bytes),
    )
    out = pl.pallas_call(
        kern,
        out_shape=jax.ShapeDtypeStruct((G, Mp, Np), out_dtype),
        grid=(G, grid_m),
        in_specs=[
            pl.BlockSpec((None, tile_m, Kp), lambda g, i: (g, i, 0)),
            pl.BlockSpec((None, Kp, Np), lambda g, i: (g, 0, 0)),   # resident w
            pl.BlockSpec((None, 1, Np), lambda g, i: (g, 0, 0)),    # resident b
        ],
        out_specs=pl.BlockSpec((None, tile_m, Np), lambda g, i: (g, i, 0)),
        compiler_params=pltpu.CompilerParams(
            dimension_semantics=("parallel", "parallel"),
            vmem_limit_bytes=_VMEM_LIMIT,
        ),
        cost_estimate=cost,
    )(x, w, b)
    return out[:, :M, :n_out]


# ----------------------------------------------------------------------------
# im2col for the kernel == 2*stride case (both RND convs: 8/4 and 4/2).
# Channels-last input [N, H, W, C] -> patches [N*OH*OW, K*K*C], K-ordering
# (kh, kw, c).  Only 4 block slices + 3 concats (layout plumbing in XLA).
# ----------------------------------------------------------------------------
def im2col_2x(x, k, s):
    assert k == 2 * s
    n, h, w, c = x.shape
    oh = (h - k) // s + 1
    ow = (w - k) // s + 1
    hc, wc = s * (oh + 1), s * (ow + 1)          # rows/cols actually used
    xb = x[:, :hc, :wc, :].reshape(n, oh + 1, s, ow + 1, s, c)
    xb = jnp.transpose(xb, (0, 1, 3, 2, 4, 5))   # (n, hb, wb, hi, wi, c)
    tl = xb[:, :oh, :ow]                         # patch rows 0..s-1, cols 0..s-1
    tr = xb[:, :oh, 1:ow + 1]                    # rows 0..s-1, cols s..2s-1
    bl = xb[:, 1:oh + 1, :ow]
    br = xb[:, 1:oh + 1, 1:ow + 1]
    top = jnp.concatenate([tl, tr], axis=4)      # (n, oh, ow, s, 2s, c)
    bot = jnp.concatenate([bl, br], axis=4)
    patches = jnp.concatenate([top, bot], axis=3)  # (n, oh, ow, 2s, 2s, c)
    return patches.reshape(n * oh * ow, k * k * c), oh, ow


# ----------------------------------------------------------------------------
# Parameters.  Created in torch layout (Conv2d: [OC, C, KH, KW], Linear:
# [512, f] with f ordered (C, H, W)) with the module's init:
#   weights: kaiming_uniform_(fan_in, relu) = U(+-sqrt(6/fan_in)),
#   biases:  constant 0.01.
# ----------------------------------------------------------------------------
def kaiming_uniform(key, shape, fan_in):
    bound = jnp.sqrt(6.0 / fan_in)
    return jax.random.uniform(key, shape, jnp.float32, -bound, bound)


def make_branch_params_torch(key, c, h, w):
    k1, k2, k3 = jax.random.split(key, 3)
    o1h, o1w = (h - 8) // 4 + 1, (w - 8) // 4 + 1
    o2h, o2w = (o1h - 4) // 2 + 1, (o1w - 4) // 2 + 1
    f = 64 * o2h * o2w
    params = {
        "conv1_w": kaiming_uniform(k1, (32, c, 8, 8), c * 8 * 8),
        "conv1_b": jnp.full((32,), 0.01, jnp.float32),
        "conv2_w": kaiming_uniform(k2, (64, 32, 4, 4), 32 * 4 * 4),
        "conv2_b": jnp.full((64,), 0.01, jnp.float32),
        "lin_w": kaiming_uniform(k3, (512, f), f),
        "lin_b": jnp.full((512,), 0.01, jnp.float32),
    }
    return params, o2h, o2w


def prepare_gemm_params(fixed_t, pred_t, oh2, ow2):
    """One-time conversion of both branches' torch-layout params into
    GEMM-ready, branch-fused/stacked, zero-padded bf16 weights + f32 biases."""

    def conv_w_gemm(w):                          # [OC,C,KH,KW] -> [KH*KW*C, OC]
        oc = w.shape[0]
        return jnp.transpose(w, (2, 3, 1, 0)).reshape(-1, oc)

    def lin_w_gemm(w):                           # torch (c,h,w) cols -> (h,w,c) rows
        lw = w.reshape(512, 64, oh2, ow2)
        return jnp.transpose(lw, (0, 2, 3, 1)).reshape(512, -1).T  # [f_hwc, 512]

    def pad_nk(m, kp, np_):
        return jnp.pad(m, ((0, kp - m.shape[0]), (0, np_ - m.shape[1])))

    # conv1: both branches share patches -> fuse along N.   [1, K1p, 128]
    w1f, w1p = conv_w_gemm(fixed_t["conv1_w"]), conv_w_gemm(pred_t["conv1_w"])
    k1p = _round_up(w1f.shape[0], 128)
    w1 = pad_nk(jnp.concatenate([w1f, w1p], axis=1), k1p, 128)
    w1 = w1[None].astype(jnp.bfloat16)
    b1 = jnp.pad(jnp.concatenate([fixed_t["conv1_b"], pred_t["conv1_b"]]),
                 (0, 64)).reshape(1, 1, 128).astype(jnp.float32)

    # conv2: branch = grid axis.                            [2, K2p, 128]
    w2f, w2p = conv_w_gemm(fixed_t["conv2_w"]), conv_w_gemm(pred_t["conv2_w"])
    k2p = _round_up(w2f.shape[0], 128)
    w2 = jnp.stack([pad_nk(w2f, k2p, 128),
                    pad_nk(w2p, k2p, 128)]).astype(jnp.bfloat16)
    b2 = jnp.stack([jnp.pad(fixed_t["conv2_b"], (0, 64)),
                    jnp.pad(pred_t["conv2_b"], (0, 64))])
    b2 = b2.reshape(2, 1, 128).astype(jnp.float32)

    # linear: branch = grid axis.                           [2, Fp, 512]
    wlf, wlp = lin_w_gemm(fixed_t["lin_w"]), lin_w_gemm(pred_t["lin_w"])
    fp = _round_up(wlf.shape[0], 128)
    wl = jnp.stack([pad_nk(wlf, fp, 512),
                    pad_nk(wlp, fp, 512)]).astype(jnp.bfloat16)
    bl = jnp.stack([fixed_t["lin_b"], pred_t["lin_b"]])
    bl = bl.reshape(2, 1, 512).astype(jnp.float32)

    return {"w1": w1, "b1": b1, "w2": w2, "b2": b2, "wl": wl, "bl": bl}


# ----------------------------------------------------------------------------
# Two-branch forward: 3 Pallas GEMM launches total, no cross-branch waste.
# ----------------------------------------------------------------------------
def rnd_forward(params, x):
    """x: [B, C, H, W] (torch layout) -> (fixed [B, 512], predictor [B, 512])."""
    B = x.shape[0]
    xl = jnp.transpose(x, (0, 2, 3, 1)).astype(jnp.bfloat16)       # NHWC bf16 once

    # --- conv1: shared patches, branch-fused weights along N ----------------
    p1, oh1, ow1 = im2col_2x(xl, 8, 4)                             # [B*oh1*ow1, 64C]
    o1 = grouped_matmul_bias(p1[None], params["w1"], params["b1"], 64,
                             relu=True, out_dtype=jnp.bfloat16)[0]  # [M1, 64]
    h1 = jnp.concatenate(
        [o1[:, :32].reshape(B, oh1, ow1, 32),
         o1[:, 32:].reshape(B, oh1, ow1, 32)], axis=0)             # [2B, oh1, ow1, 32]

    # --- conv2: branch = grid axis ------------------------------------------
    p2, oh2, ow2 = im2col_2x(h1, 4, 2)                             # [2B*oh2*ow2, 512]
    m2 = B * oh2 * ow2
    o2 = grouped_matmul_bias(p2.reshape(2, m2, -1), params["w2"], params["b2"],
                             64, relu=True, out_dtype=jnp.bfloat16)  # [2, m2, 64]
    flat = o2.reshape(2, B, oh2 * ow2 * 64)                        # (h, w, c) flatten

    # --- linear: branch = grid axis ------------------------------------------
    o3 = grouped_matmul_bias(flat, params["wl"], params["bl"], 512,
                             relu=False, out_dtype=jnp.float32)    # [2, B, 512]
    return o3[0], o3[1]


# ----------------------------------------------------------------------------
# Pure-JAX f32 reference (matches the torch module semantics) for validation.
# ----------------------------------------------------------------------------
def _ref_branch(p, x):
    dn = ("NCHW", "OIHW", "NCHW")
    hi = jax.lax.Precision.HIGHEST
    y = jax.lax.conv_general_dilated(x, p["conv1_w"], (4, 4), "VALID",
                                     dimension_numbers=dn, precision=hi)
    y = jax.nn.relu(y + p["conv1_b"][None, :, None, None])
    y = jax.lax.conv_general_dilated(y, p["conv2_w"], (2, 2), "VALID",
                                     dimension_numbers=dn, precision=hi)
    y = jax.nn.relu(y + p["conv2_b"][None, :, None, None])
    y = y.reshape(y.shape[0], -1)                                  # NCHW flatten
    return jnp.dot(y, p["lin_w"].T, precision=hi) + p["lin_b"]


def rnd_forward_ref(fixed_t, pred_t, x):
    return _ref_branch(fixed_t, x), _ref_branch(pred_t, x)


if __name__ == "__main__":
    # Module-consistent small shapes: input_shape = (h, w, c) = (32, 32, 4)
    # (the 8/4 -> 4/2 conv stack needs H, W >= 20), batch = 2.
    # PyTorch forward input is NCHW: [2, 4, 32, 32].
    key = jax.random.PRNGKey(0)
    k_fixed, k_pred, k_x = jax.random.split(key, 3)

    H, W, C, B = 32, 32, 4, 2
    fixed_t, oh2, ow2 = make_branch_params_torch(k_fixed, C, H, W)
    pred_t, _, _ = make_branch_params_torch(k_pred, C, H, W)
    params = prepare_gemm_params(fixed_t, pred_t, oh2, ow2)        # one-time prep

    x = jax.random.normal(k_x, (B, C, H, W), jnp.float32)

    fwd = jax.jit(rnd_forward)
    fixed_out, pred_out = fwd(params, x)
    jax.block_until_ready((fixed_out, pred_out))

    assert fixed_out.shape == (B, 512) and pred_out.shape == (B, 512)
    assert fixed_out.dtype == jnp.float32 and pred_out.dtype == jnp.float32
    assert bool(jnp.all(jnp.isfinite(fixed_out)))
    assert bool(jnp.all(jnp.isfinite(pred_out)))

    # Validate against the f32 reference (bf16 GEMM inputs, f32 accumulation).
    ref_fixed, ref_pred = rnd_forward_ref(fixed_t, pred_t, x)

    def rel_err(a, b):
        return float(jnp.linalg.norm(a - b) / (jnp.linalg.norm(b) + 1e-12))

    ef, ep = rel_err(fixed_out, ref_fixed), rel_err(pred_out, ref_pred)
    assert ef < 2e-2, f"fixed branch rel err {ef}"
    assert ep < 2e-2, f"predictor branch rel err {ep}"

    print("KERNEL_OK")
</pallas_src>

<mosaic_0001>
module attributes {stable_mosaic.version = 11 : i64} {
  func.func @_gemm_bias_kernel(%arg0: i32, %arg1: i32, %arg2: memref<1x112x256xbf16, #tpu.memory_space<vmem>>, %arg3: memref<1x256x128xbf16, #tpu.memory_space<vmem>>, %arg4: memref<1x1x128xf32, #tpu.memory_space<vmem>>, %arg5: memref<1x112x128xbf16, #tpu.memory_space<vmem>>) attributes {dimension_semantics = [#tpu.dimension_semantics<parallel>, #tpu.dimension_semantics<parallel>], iteration_bounds = array<i64: 1, 1>, scalar_prefetch = 0 : i64, scratch_operands = 0 : i64, tpu.core_type = #tpu.core_type<tc>, window_params = [{transform_indices = @transform_0, window_bounds = array<i64: 1, 112, 256>}, {transform_indices = @transform_1, window_bounds = array<i64: 1, 256, 128>}, {transform_indices = @transform_2, window_bounds = array<i64: 1, 1, 128>}, {transform_indices = @transform_3, window_bounds = array<i64: 1, 112, 128>}]} {
    %c0 = arith.constant 0 : index
    %c0_0 = arith.constant 0 : index
    %c0_1 = arith.constant 0 : index
    %0 = vector.load %arg2[%c0, %c0_0, %c0_1] : memref<1x112x256xbf16, #tpu.memory_space<vmem>>, vector<1x112x256xbf16>
    %1 = vector.shape_cast %0 : vector<1x112x256xbf16> to vector<112x256xbf16>
    %c0_2 = arith.constant 0 : index
    %c0_3 = arith.constant 0 : index
    %c0_4 = arith.constant 0 : index
    %2 = vector.load %arg3[%c0_2, %c0_3, %c0_4] : memref<1x256x128xbf16, #tpu.memory_space<vmem>>, vector<1x256x128xbf16>
    %3 = vector.shape_cast %2 : vector<1x256x128xbf16> to vector<256x128xbf16>
    %cst = arith.constant dense<0.000000e+00> : vector<112x128xf32>
    %4 = tpu.matmul %1, %3, %cst {dimension_numbers = #tpu.dot_dimension_numbers<[1], [0], [0], [1], [0, 0, 1, 1], [], []>} : vector<112x256xbf16>, vector<256x128xbf16>, vector<112x128xf32> -> vector<112x128xf32>
    %c0_5 = arith.constant 0 : index
    %c0_6 = arith.constant 0 : index
    %c0_7 = arith.constant 0 : index
    %5 = vector.load %arg4[%c0_5, %c0_6, %c0_7] : memref<1x1x128xf32, #tpu.memory_space<vmem>>, vector<1x1x128xf32>
    %6 = vector.shape_cast %5 : vector<1x1x128xf32> to vector<1x128xf32>
    %7 = vector.broadcast %6 : vector<1x128xf32> to vector<112x128xf32>
    %8 = arith.addf %4, %7 : vector<112x128xf32>
    %cst_8 = arith.constant 0.000000e+00 : f32
    %9 = vector.broadcast %cst_8 : f32 to vector<112x128xf32>
    %10 = arith.maximumf %8, %9 : vector<112x128xf32>
    %11 = arith.truncf %10 : vector<112x128xf32> to vector<112x128xbf16>
    %c0_9 = arith.constant 0 : index
    %c0_10 = arith.constant 0 : index
    %c0_11 = arith.constant 0 : index
    %12 = vector.load %arg5[%c0_9, %c0_10, %c0_11] : memref<1x112x128xbf16, #tpu.memory_space<vmem>>, vector<1x112x128xbf16>
    %13 = vector.shape_cast %12 : vector<1x112x128xbf16> to vector<112x128xbf16>
    %14 = vector.shape_cast %11 : vector<112x128xbf16> to vector<1x112x128xbf16>
    tpu.vector_store %arg5[%c0_9, %c0_10, %c0_11], %14 {strides = array<i32>} : memref<1x112x128xbf16, #tpu.memory_space<vmem>>, vector<1x112x128xbf16>,
    return
  }
  func.func @transform_0(%arg0: i32, %arg1: i32) -> (i32, i32, i32) {
    %c0_i32 = arith.constant 0 : i32
    %c0_i32_0 = arith.constant 0 : i32
    return %arg0, %arg1, %c0_i32 : i32, i32, i32
  }
  func.func @transform_1(%arg0: i32, %arg1: i32) -> (i32, i32, i32) {
    %c0_i32 = arith.constant 0 : i32
    %c0_i32_0 = arith.constant 0 : i32
    %c0_i32_1 = arith.constant 0 : i32
    return %arg0, %c0_i32, %c0_i32_0 : i32, i32, i32
  }
  func.func @transform_2(%arg0: i32, %arg1: i32) -> (i32, i32, i32) {
    %c0_i32 = arith.constant 0 : i32
    %c0_i32_0 = arith.constant 0 : i32
    %c0_i32_1 = arith.constant 0 : i32
    return %arg0, %c0_i32, %c0_i32_0 : i32, i32, i32
  }
  func.func @transform_3(%arg0: i32, %arg1: i32) -> (i32, i32, i32) {
    %c0_i32 = arith.constant 0 : i32
    %c0_i32_0 = arith.constant 0 : i32
    return %arg0, %arg1, %c0_i32 : i32, i32, i32
  }
}

module attributes {stable_mosaic.version = 11 : i64} {
  func.func @_gemm_bias_kernel(%arg0: i32, %arg1: i32, %arg2: memref<1x16x512xbf16, #tpu.memory_space<vmem>>, %arg3: memref<1x512x128xbf16, #tpu.memory_space<vmem>>, %arg4: memref<1x1x128xf32, #tpu.memory_space<vmem>>, %arg5: memref<1x16x128xbf16, #tpu.memory_space<vmem>>) attributes {dimension_semantics = [#tpu.dimension_semantics<parallel>, #tpu.dimension_semantics<parallel>], iteration_bounds = array<i64: 2, 1>, scalar_prefetch = 0 : i64, scratch_operands = 0 : i64, tpu.core_type = #tpu.core_type<tc>, window_params = [{transform_indices = @transform_0, window_bounds = array<i64: 1, 16, 512>}, {transform_indices = @transform_1, window_bounds = array<i64: 1, 512, 128>}, {transform_indices = @transform_2, window_bounds = array<i64: 1, 1, 128>}, {transform_indices = @transform_3, window_bounds = array<i64: 1, 16, 128>}]} {
    %c0 = arith.constant 0 : index
    %c0_0 = arith.constant 0 : index
    %c0_1 = arith.constant 0 : index
    %0 = vector.load %arg2[%c0, %c0_0, %c0_1] : memref<1x16x512xbf16, #tpu.memory_space<vmem>>, vector<1x16x512xbf16>
    %1 = vector.shape_cast %0 : vector<1x16x512xbf16> to vector<16x512xbf16>
    %c0_2 = arith.constant 0 : index
    %c0_3 = arith.constant 0 : index
    %c0_4 = arith.constant 0 : index
    %2 = vector.load %arg3[%c0_2, %c0_3, %c0_4] : memref<1x512x128xbf16, #tpu.memory_space<vmem>>, vector<1x512x128xbf16>
    %3 = vector.shape_cast %2 : vector<1x512x128xbf16> to vector<512x128xbf16>
    %cst = arith.constant dense<0.000000e+00> : vector<16x128xf32>
    %4 = tpu.matmul %1, %3, %cst {dimension_numbers = #tpu.dot_dimension_numbers<[1], [0], [0], [1], [0, 0, 1, 1], [], []>} : vector<16x512xbf16>, vector<512x128xbf16>, vector<16x128xf32> -> vector<16x128xf32>
    %c0_5 = arith.constant 0 : index
    %c0_6 = arith.constant 0 : index
    %c0_7 = arith.constant 0 : index
    %5 = vector.load %arg4[%c0_5, %c0_6, %c0_7] : memref<1x1x128xf32, #tpu.memory_space<vmem>>, vector<1x1x128xf32>
    %6 = vector.shape_cast %5 : vector<1x1x128xf32> to vector<1x128xf32>
    %7 = vector.broadcast %6 : vector<1x128xf32> to vector<16x128xf32>
    %8 = arith.addf %4, %7 : vector<16x128xf32>
    %cst_8 = arith.constant 0.000000e+00 : f32
    %9 = vector.broadcast %cst_8 : f32 to vector<16x128xf32>
    %10 = arith.maximumf %8, %9 : vector<16x128xf32>
    %11 = arith.truncf %10 : vector<16x128xf32> to vector<16x128xbf16>
    %c0_9 = arith.constant 0 : index
    %c0_10 = arith.constant 0 : index
    %c0_11 = arith.constant 0 : index
    %12 = vector.load %arg5[%c0_9, %c0_10, %c0_11] : memref<1x16x128xbf16, #tpu.memory_space<vmem>>, vector<1x16x128xbf16>
    %13 = vector.shape_cast %12 : vector<1x16x128xbf16> to vector<16x128xbf16>
    %14 = vector.shape_cast %11 : vector<16x128xbf16> to vector<1x16x128xbf16>
    tpu.vector_store %arg5[%c0_9, %c0_10, %c0_11], %14 {strides = array<i32>} : memref<1x16x128xbf16, #tpu.memory_space<vmem>>, vector<1x16x128xbf16>,
    return
  }
  func.func @transform_0(%arg0: i32, %arg1: i32) -> (i32, i32, i32) {
    %c0_i32 = arith.constant 0 : i32
    %c0_i32_0 = arith.constant 0 : i32
    return %arg0, %arg1, %c0_i32 : i32, i32, i32
  }
  func.func @transform_1(%arg0: i32, %arg1: i32) -> (i32, i32, i32) {
    %c0_i32 = arith.constant 0 : i32
    %c0_i32_0 = arith.constant 0 : i32
    %c0_i32_1 = arith.constant 0 : i32
    return %arg0, %c0_i32, %c0_i32_0 : i32, i32, i32
  }
  func.func @transform_2(%arg0: i32, %arg1: i32) -> (i32, i32, i32) {
    %c0_i32 = arith.constant 0 : i32
    %c0_i32_0 = arith.constant 0 : i32
    %c0_i32_1 = arith.constant 0 : i32
    return %arg0, %c0_i32, %c0_i32_0 : i32, i32, i32
  }
  func.func @transform_3(%arg0: i32, %arg1: i32) -> (i32, i32, i32) {
    %c0_i32 = arith.constant 0 : i32
    %c0_i32_0 = arith.constant 0 : i32
    return %arg0, %arg1, %c0_i32 : i32, i32, i32
  }
}

module attributes {stable_mosaic.version = 11 : i64} {
  func.func @_gemm_bias_kernel(%arg0: i32, %arg1: i32, %arg2: memref<1x16x256xbf16, #tpu.memory_space<vmem>>, %arg3: memref<1x256x512xbf16, #tpu.memory_space<vmem>>, %arg4: memref<1x1x512xf32, #tpu.memory_space<vmem>>, %arg5: memref<1x16x512xf32, #tpu.memory_space<vmem>>) attributes {dimension_semantics = [#tpu.dimension_semantics<parallel>, #tpu.dimension_semantics<parallel>], iteration_bounds = array<i64: 2, 1>, scalar_prefetch = 0 : i64, scratch_operands = 0 : i64, tpu.core_type = #tpu.core_type<tc>, window_params = [{transform_indices = @transform_0, window_bounds = array<i64: 1, 16, 256>}, {transform_indices = @transform_1, window_bounds = array<i64: 1, 256, 512>}, {transform_indices = @transform_2, window_bounds = array<i64: 1, 1, 512>}, {transform_indices = @transform_3, window_bounds = array<i64: 1, 16, 512>}]} {
    %c0 = arith.constant 0 : index
    %c0_0 = arith.constant 0 : index
    %c0_1 = arith.constant 0 : index
    %0 = vector.load %arg2[%c0, %c0_0, %c0_1] : memref<1x16x256xbf16, #tpu.memory_space<vmem>>, vector<1x16x256xbf16>
    %1 = vector.shape_cast %0 : vector<1x16x256xbf16> to vector<16x256xbf16>
    %c0_2 = arith.constant 0 : index
    %c0_3 = arith.constant 0 : index
    %c0_4 = arith.constant 0 : index
    %2 = vector.load %arg3[%c0_2, %c0_3, %c0_4] : memref<1x256x512xbf16, #tpu.memory_space<vmem>>, vector<1x256x512xbf16>
    %3 = vector.shape_cast %2 : vector<1x256x512xbf16> to vector<256x512xbf16>
    %cst = arith.constant dense<0.000000e+00> : vector<16x512xf32>
    %4 = tpu.matmul %1, %3, %cst {dimension_numbers = #tpu.dot_dimension_numbers<[1], [0], [0], [1], [0, 0, 1, 1], [], []>} : vector<16x256xbf16>, vector<256x512xbf16>, vector<16x512xf32> -> vector<16x512xf32>
    %c0_5 = arith.constant 0 : index
    %c0_6 = arith.constant 0 : index
    %c0_7 = arith.constant 0 : index
    %5 = vector.load %arg4[%c0_5, %c0_6, %c0_7] : memref<1x1x512xf32, #tpu.memory_space<vmem>>, vector<1x1x512xf32>
    %6 = vector.shape_cast %5 : vector<1x1x512xf32> to vector<1x512xf32>
    %7 = vector.broadcast %6 : vector<1x512xf32> to vector<16x512xf32>
    %8 = arith.addf %4, %7 : vector<16x512xf32>
    %c0_8 = arith.constant 0 : index
    %c0_9 = arith.constant 0 : index
    %c0_10 = arith.constant 0 : index
    %9 = vector.load %arg5[%c0_8, %c0_9, %c0_10] : memref<1x16x512xf32, #tpu.memory_space<vmem>>, vector<1x16x512xf32>
    %10 = vector.shape_cast %9 : vector<1x16x512xf32> to vector<16x512xf32>
    %11 = vector.shape_cast %8 : vector<16x512xf32> to vector<1x16x512xf32>
    tpu.vector_store %arg5[%c0_8, %c0_9, %c0_10], %11 {strides = array<i32>} : memref<1x16x512xf32, #tpu.memory_space<vmem>>, vector<1x16x512xf32>,
    return
  }
  func.func @transform_0(%arg0: i32, %arg1: i32) -> (i32, i32, i32) {
    %c0_i32 = arith.constant 0 : i32
    %c0_i32_0 = arith.constant 0 : i32
    return %arg0, %arg1, %c0_i32 : i32, i32, i32
  }
  func.func @transform_1(%arg0: i32, %arg1: i32) -> (i32, i32, i32) {
    %c0_i32 = arith.constant 0 : i32
    %c0_i32_0 = arith.constant 0 : i32
    %c0_i32_1 = arith.constant 0 : i32
    return %arg0, %c0_i32, %c0_i32_0 : i32, i32, i32
  }
  func.func @transform_2(%arg0: i32, %arg1: i32) -> (i32, i32, i32) {
    %c0_i32 = arith.constant 0 : i32
    %c0_i32_0 = arith.constant 0 : i32
    %c0_i32_1 = arith.constant 0 : i32
    return %arg0, %c0_i32, %c0_i32_0 : i32, i32, i32
  }
  func.func @transform_3(%arg0: i32, %arg1: i32) -> (i32, i32, i32) {
    %c0_i32 = arith.constant 0 : i32
    %c0_i32_0 = arith.constant 0 : i32
    return %arg0, %arg1, %c0_i32 : i32, i32, i32
  }
}

</mosaic_0001>

<llo_original>
// kernel: rnd_forward.3
$region0: #{rnd_forward.3}
  #allocation0 [shape = 'u32[]', space=smem, size = 0x4, offset = 0x4, fixed_abs, tag = 'smem constant byte address 0x4 - core index']
  #allocation1 [shape = 'u32[72,128]{1,0:T(1,128)}', space=vmem, size = 0x9000, scoped, tag = 'internal scratch']
  %s0 = inlined_call_operand.vmem [shape: bf16[1,112,256], index: 0, kind: input, shape index: {}]
  %s1 = inlined_call_operand.vmem [shape: bf16[1,256,128], index: 1, kind: input, shape index: {}]
  %s2 = inlined_call_operand.vmem [shape: f32[1,1,128], index: 2, kind: input, shape index: {}]
  %s3 = inlined_call_operand.vmem [shape: bf16[1,112,128], index: 3, kind: output, shape index: {}]
  %s4 = sld [smem:[#allocation0]]
  $region22: #{rnd_forward.3} parent=0
    _
  %s6 = ssub.s32 1, %s4
  %s7 = scalar_select 0, %s6, %s4
  // Predicated region
  $region2: #{rnd_forward.3} parent=0 // pred_check
    _
  $region3: #{rnd_forward.3} parent=0 // pred_check_branch
    %9 = sbr.rel (0) target = $region5
  $region4: #{rnd_forward.3} parent=0 // pred_region
    _
  $region5: #{rnd_forward.3} parent=0 // pred_fallthru
    _
  // Predicated region
  $region6: #{rnd_forward.3} parent=0 // pred_check
    _
  $region7: #{rnd_forward.3} parent=0 // pred_check_branch
    %11 = sbr.rel (0) target = $region9
  $region8: #{rnd_forward.3} parent=0 // pred_region
    _
  $region9: #{rnd_forward.3} parent=0 // pred_fallthru
    _
  // Predicated region
  $region10: #{rnd_forward.3} parent=0 // pred_check
    _
  $region11: #{rnd_forward.3} parent=0 // pred_check_branch
    %13 = sbr.rel (0) target = $region13
  $region12: #{rnd_forward.3} parent=0 // pred_region
    _
  $region13: #{rnd_forward.3} parent=0 // pred_fallthru
    _
  %v14 = vld [vmem:[%s0] sm:$0xff]
  %v15 = vld [vmem:[%s0 + $0x8] sm:$0xff]
  %v16 = vld [vmem:[%s0 + $0x10] sm:$0xff]
  %v17 = vld [vmem:[%s0 + $0x18] sm:$0xff]
  %v18 = vld [vmem:[%s0 + $0x20] sm:$0xff]
  %v19 = vld [vmem:[%s0 + $0x28] sm:$0xff]
  %v20 = vld [vmem:[%s0 + $0x30] sm:$0xff]
  %v21 = vld [vmem:[%s0 + $0x38] sm:$0xff]
  %v22 = vld [vmem:[%s0 + $0x40] sm:$0xff]
  %v23 = vld [vmem:[%s0 + $0x48] sm:$0xff]
  %v24 = vld [vmem:[%s0 + $0x50] sm:$0xff]
  %v25 = vld [vmem:[%s0 + $0x58] sm:$0xff]
  %v26 = vld [vmem:[%s0 + $0x60] sm:$0xff]
  %v27 = vld [vmem:[%s0 + $0x68] sm:$0xff]
  %v28 = vld [vmem:[%s1] sm:$0xf]
  %v29 = vld [vmem:[%s1 + $0x4] sm:$0xf]
  %v30 = vld [vmem:[%s1 + $0x8] sm:$0xf]
  %v31 = vld [vmem:[%s1 + $0xc] sm:$0xf]
  %v32 = vld [vmem:[%s1 + $0x10] sm:$0xf]
  %v33 = vld [vmem:[%s1 + $0x14] sm:$0xf]
  %v34 = vld [vmem:[%s1 + $0x18] sm:$0xf]
  %v35 = vld [vmem:[%s1 + $0x1c] sm:$0xf]
  %v36 = vld [vmem:[%s1 + $0x20] sm:$0xf]
  %v37 = vld [vmem:[%s1 + $0x24] sm:$0xf]
  %v38 = vld [vmem:[%s1 + $0x28] sm:$0xf]
  %v39 = vld [vmem:[%s1 + $0x2c] sm:$0xf]
  %v40 = vld [vmem:[%s1 + $0x30] sm:$0xf]
  %v41 = vld [vmem:[%s1 + $0x34] sm:$0xf]
  %v42 = vld [vmem:[%s1 + $0x38] sm:$0xf]
  %v43 = vld [vmem:[%s1 + $0x3c] sm:$0xf]
  %v44 = vld [vmem:[%s1 + $0x40] sm:$0xf]
  %v45 = vld [vmem:[%s1 + $0x44] sm:$0xf]
  %v46 = vld [vmem:[%s1 + $0x48] sm:$0xf]
  %v47 = vld [vmem:[%s1 + $0x4c] sm:$0xf]
  %v48 = vld [vmem:[%s1 + $0x50] sm:$0xf]
  %v49 = vld [vmem:[%s1 + $0x54] sm:$0xf]
  %v50 = vld [vmem:[%s1 + $0x58] sm:$0xf]
  %v51 = vld [vmem:[%s1 + $0x5c] sm:$0xf]
  %v52 = vld [vmem:[%s1 + $0x60] sm:$0xf]
  %v53 = vld [vmem:[%s1 + $0x64] sm:$0xf]
  %v54 = vld [vmem:[%s1 + $0x68] sm:$0xf]
  %v55 = vld [vmem:[%s1 + $0x6c] sm:$0xf]
  %v56 = vld [vmem:[%s1 + $0x70] sm:$0xf]
  %v57 = vld [vmem:[%s1 + $0x74] sm:$0xf]
  %v58 = vld [vmem:[%s1 + $0x78] sm:$0xf]
  %v59 = vld [vmem:[%s1 + $0x7c] sm:$0xf]
  %v60 = vld [vmem:[%s2] sm:$0x1]
  %v62 = vperm.slane %v60, 0
  %v78 = vunpack.c.l.b16 %v14
  %v79 = vunpack.c.h.b16 %v14
  %v80 = vunpack.c.l.b16 %v15
  %v81 = vunpack.c.h.b16 %v15
  %v82 = vunpack.c.l.b16 %v16
  %v83 = vunpack.c.h.b16 %v16
  %v84 = vunpack.c.l.b16 %v17
  %v85 = vunpack.c.h.b16 %v17
  %v86 = vunpack.c.l.b16 %v18
  %v87 = vunpack.c.h.b16 %v18
  %v88 = vunpack.c.l.b16 %v19
  %v89 = vunpack.c.h.b16 %v19
  %v90 = vunpack.c.l.b16 %v20
  %v91 = vunpack.c.h.b16 %v20
  %v92 = vunpack.c.l.b16 %v21
  %v93 = vunpack.c.h.b16 %v21
  %v94 = vunpack.c.l.b16 %v22
  %v95 = vunpack.c.h.b16 %v22
  %v96 = vunpack.c.l.b16 %v23
  %v97 = vunpack.c.h.b16 %v23
  %v98 = vunpack.c.l.b16 %v24
  %v99 = vunpack.c.h.b16 %v24
  %v100 = vunpack.c.l.b16 %v25
  %v101 = vunpack.c.h.b16 %v25
  %v102 = vunpack.c.l.b16 %v26
  %v103 = vunpack.c.h.b16 %v26
  %v104 = vunpack.c.l.b16 %v27
  %v105 = vunpack.c.h.b16 %v27
  %v106 = vpack.c.b16 %v80, %v78
  %v107 = vpack.c.b16 %v81, %v79
  %v108 = vpack.c.b16 %v84, %v82
  %v109 = vpack.c.b16 %v85, %v83
  %v110 = vpack.c.b16 %v88, %v86
  %v111 = vpack.c.b16 %v89, %v87
  %v112 = vpack.c.b16 %v92, %v90
  %v113 = vpack.c.b16 %v93, %v91
  %v114 = vpack.c.b16 %v96, %v94
  %v115 = vpack.c.b16 %v97, %v95
  %v116 = vpack.c.b16 %v100, %v98
  %v117 = vpack.c.b16 %v101, %v99
  %v118 = vpack.c.b16 %v104, %v102
  %v119 = vpack.c.b16 %v105, %v103
  %v166 = vunpack.c.l.b16 %v28
  %v167 = vunpack.c.l.b16 %v29
  %v168 = vunpack.c.l.b16 %v30
  %v169 = vunpack.c.l.b16 %v31
  %v170 = vunpack.c.l.b16 %v32
  %v171 = vunpack.c.l.b16 %v33
  %v172 = vunpack.c.l.b16 %v34
  %v173 = vunpack.c.l.b16 %v35
  %v174 = vunpack.c.l.b16 %v36
  %v175 = vunpack.c.l.b16 %v37
  %v176 = vunpack.c.l.b16 %v38
  %v177 = vunpack.c.l.b16 %v39
  %v178 = vunpack.c.l.b16 %v40
  %v179 = vunpack.c.l.b16 %v41
  %v180 = vunpack.c.l.b16 %v42
  %v181 = vunpack.c.l.b16 %v43
  %v182 = vunpack.c.l.b16 %v44
  %v183 = vunpack.c.l.b16 %v45
  %v184 = vunpack.c.l.b16 %v46
  %v185 = vunpack.c.l.b16 %v47
  %v186 = vunpack.c.l.b16 %v48
  %v187 = vunpack.c.l.b16 %v49
  %v188 = vunpack.c.l.b16 %v50
  %v189 = vunpack.c.l.b16 %v51
  %v190 = vunpack.c.l.b16 %v52
  %v191 = vunpack.c.l.b16 %v53
  %v192 = vunpack.c.l.b16 %v54
  %v193 = vunpack.c.l.b16 %v55
  %v194 = vunpack.c.l.b16 %v56
  %v195 = vunpack.c.l.b16 %v57
  %v196 = vunpack.c.l.b16 %v58
  %v197 = vunpack.c.l.b16 %v59
  %v198 = vpack.c.b16 %v167, %v166
  %v199 = vpack.c.b16 %v169, %v168
  %v200 = vpack.c.b16 %v171, %v170
  %v201 = vpack.c.b16 %v173, %v172
  %v202 = vpack.c.b16 %v175, %v174
  %v203 = vpack.c.b16 %v177, %v176
  %v204 = vpack.c.b16 %v179, %v178
  %v205 = vpack.c.b16 %v181, %v180
  %v206 = vpack.c.b16 %v183, %v182
  %v207 = vpack.c.b16 %v185, %v184
  %v208 = vpack.c.b16 %v187, %v186
  %v209 = vpack.c.b16 %v189, %v188
  %v210 = vpack.c.b16 %v191, %v190
  %v211 = vpack.c.b16 %v193, %v192
  %v212 = vpack.c.b16 %v195, %v194
  %v213 = vpack.c.b16 %v197, %v196
  %230 = vmatpush.bf16.msra.mxu0 %v205
  %231 = vmatpush.bf16.msra.mxu0 %v204
  %232 = vmatpush.bf16.msra.mxu0 %v203
  %233 = vmatpush.bf16.msra.mxu0 %v202
  %234 = vmatpush.bf16.msra.mxu0 %v201
  %235 = vmatpush.bf16.msra.mxu0 %v200
  %236 = vmatpush.bf16.msra.mxu0 %v199
  %237 = vmatpush.bf16.msra.mxu0 %v198
  %238 = vmatmul.bf16.gmra.mxu0 %v106
  %v239 = vpop.f32.mrf.mxu0
  %v240 = vadd.f32 %v62, %v239
  %v241 = vpop.f32.mrf.mxu0
  %v242 = vadd.f32 %v62, %v241
  %243 = vmatmul.bf16.gmra.mxu0 %v108
  %v244 = vpop.f32.mrf.mxu0
  %v245 = vadd.f32 %v62, %v244
  %v246 = vpop.f32.mrf.mxu0
  %v247 = vadd.f32 %v62, %v246
  %248 = vmatmul.bf16.gmra.mxu0 %v110
  %v249 = vpop.f32.mrf.mxu0
  %v250 = vadd.f32 %v62, %v249
  %v251 = vpop.f32.mrf.mxu0
  %v252 = vadd.f32 %v62, %v251
  %253 = vmatmul.bf16.gmra.mxu0 %v112
  %v254 = vpop.f32.mrf.mxu0
  %v255 = vadd.f32 %v62, %v254
  %v256 = vpop.f32.mrf.mxu0
  %v257 = vadd.f32 %v62, %v256
  %258 = vmatmul.bf16.gmra.mxu0 %v114
  %v259 = vpop.f32.mrf.mxu0
  %v260 = vadd.f32 %v62, %v259
  %v261 = vpop.f32.mrf.mxu0
  %v262 = vadd.f32 %v62, %v261
  %263 = vmatmul.bf16.gmra.mxu0 %v116
  %v264 = vpop.f32.mrf.mxu0
  %v265 = vadd.f32 %v62, %v264
  %v266 = vpop.f32.mrf.mxu0
  %v267 = vadd.f32 %v62, %v266
  %268 = vmatmul.bf16.gmra.mxu0 %v118
  %v269 = vpop.f32.mrf.mxu0
  %v270 = vadd.f32 %v62, %v269
  %v271 = vpop.f32.mrf.mxu0
  %v272 = vadd.f32 %v62, %v271
  %273 = vdwg.mxu0
  %274 = vmatpush.bf16.msra.mxu0 %v213
  %275 = vmatpush.bf16.msra.mxu0 %v212
  %276 = vmatpush.bf16.msra.mxu0 %v211
  %277 = vmatpush.bf16.msra.mxu0 %v210
  %278 = vmatpush.bf16.msra.mxu0 %v209
  %279 = vmatpush.bf16.msra.mxu0 %v208
  %280 = vmatpush.bf16.msra.mxu0 %v207
  %281 = vmatpush.bf16.msra.mxu0 %v206
  %282 = vmatmul.bf16.gmra.mxu0 %v107
  %v283 = vpop.f32.mrf.mxu0
  %v284 = vadd.f32 %v240, %v283
  %v285 = vpop.f32.mrf.mxu0
  %v286 = vadd.f32 %v242, %v285
  %287 = vmatmul.bf16.gmra.mxu0 %v109
  %v288 = vpop.f32.mrf.mxu0
  %v289 = vadd.f32 %v245, %v288
  %v290 = vpop.f32.mrf.mxu0
  %v291 = vadd.f32 %v247, %v290
  %292 = vmatmul.bf16.gmra.mxu0 %v111
  %v293 = vpop.f32.mrf.mxu0
  %v294 = vadd.f32 %v250, %v293
  %v295 = vpop.f32.mrf.mxu0
  %v296 = vadd.f32 %v252, %v295
  %297 = vmatmul.bf16.gmra.mxu0 %v113
  %v298 = vpop.f32.mrf.mxu0
  %v299 = vadd.f32 %v255, %v298
  %v300 = vpop.f32.mrf.mxu0
  %v301 = vadd.f32 %v257, %v300
  %302 = vmatmul.bf16.gmra.mxu0 %v115
  %v303 = vpop.f32.mrf.mxu0
  %v304 = vadd.f32 %v260, %v303
  %v305 = vpop.f32.mrf.mxu0
  %v306 = vadd.f32 %v262, %v305
  %307 = vmatmul.bf16.gmra.mxu0 %v117
  %v308 = vpop.f32.mrf.mxu0
  %v309 = vadd.f32 %v265, %v308
  %v310 = vpop.f32.mrf.mxu0
  %v311 = vadd.f32 %v267, %v310
  %312 = vmatmul.bf16.gmra.mxu0 %v119
  %v313 = vpop.f32.mrf.mxu0
  %v314 = vadd.f32 %v270, %v313
  %v315 = vpop.f32.mrf.mxu0
  %v316 = vadd.f32 %v272, %v315
  %317 = vdwg.mxu0
  %v318 = vmax.f32 %v284, 0.0
  %v319 = vmax.f32 %v286, 0.0
  %v320 = vmax.f32 %v289, 0.0
  %v321 = vmax.f32 %v291, 0.0
  %v322 = vmax.f32 %v294, 0.0
  %v323 = vmax.f32 %v296, 0.0
  %v324 = vmax.f32 %v299, 0.0
  %v325 = vmax.f32 %v301, 0.0
  %v326 = vmax.f32 %v304, 0.0
  %v327 = vmax.f32 %v306, 0.0
  %v328 = vmax.f32 %v309, 0.0
  %v329 = vmax.f32 %v311, 0.0
  %v330 = vmax.f32 %v314, 0.0
  %v331 = vmax.f32 %v316, 0.0
  %v332 = vpack.c.bf16 %v318, %v318
  %v333 = vpack.c.bf16 %v319, %v319
  %v334 = vpack.c.bf16 %v320, %v320
  %v335 = vpack.c.bf16 %v321, %v321
  %v336 = vpack.c.bf16 %v322, %v322
  %v337 = vpack.c.bf16 %v323, %v323
  %v338 = vpack.c.bf16 %v324, %v324
  %v339 = vpack.c.bf16 %v325, %v325
  %v340 = vpack.c.bf16 %v326, %v326
  %v341 = vpack.c.bf16 %v327, %v327
  %v342 = vpack.c.bf16 %v328, %v328
  %v343 = vpack.c.bf16 %v329, %v329
  %v344 = vpack.c.bf16 %v330, %v330
  %v345 = vpack.c.bf16 %v331, %v331
  %346 = vst [vmem:[%s3] sm:$0xf] %v332
  %347 = vst [vmem:[%s3 + $0x4] sm:$0xf] %v333
  %348 = vst [vmem:[%s3 + $0x8] sm:$0xf] %v334
  %349 = vst [vmem:[%s3 + $0xc] sm:$0xf] %v335
  %350 = vst [vmem:[%s3 + $0x10] sm:$0xf] %v336
  %351 = vst [vmem:[%s3 + $0x14] sm:$0xf] %v337
  %352 = vst [vmem:[%s3 + $0x18] sm:$0xf] %v338
  %353 = vst [vmem:[%s3 + $0x1c] sm:$0xf] %v339
  %354 = vst [vmem:[%s3 + $0x20] sm:$0xf] %v340
  %355 = vst [vmem:[%s3 + $0x24] sm:$0xf] %v341
  %356 = vst [vmem:[%s3 + $0x28] sm:$0xf] %v342
  %357 = vst [vmem:[%s3 + $0x2c] sm:$0xf] %v343
  %358 = vst [vmem:[%s3 + $0x30] sm:$0xf] %v344
  %359 = vst [vmem:[%s3 + $0x34] sm:$0xf] %v345
  // Predicated region
  $region14: #{rnd_forward.3} parent=0 // pred_check
    _
  $region15: #{rnd_forward.3} parent=0 // pred_check_branch
    %361 = sbr.rel (0) target = $region17
  $region16: #{rnd_forward.3} parent=0 // pred_region
    _
  $region17: #{rnd_forward.3} parent=0 // pred_fallthru
    _
  // Predicated region
  $region18: #{rnd_forward.3} parent=0 // pred_check
    _
  $region19: #{rnd_forward.3} parent=0 // pred_check_branch
    %363 = sbr.rel (0) target = $region21
  $region20: #{rnd_forward.3} parent=0 // pred_region
    _
  $region21: #{rnd_forward.3} parent=0 // pred_fallthru
    _

// kernel: rnd_forward.4
$region0: #{rnd_forward.4}
  #allocation0 [shape = 'u32[]', space=smem, size = 0x4, offset = 0x4, fixed_abs, tag = 'smem constant byte address 0x4 - core index']
  #allocation1 [shape = 'u32[72,128]{1,0:T(1,128)}', space=vmem, size = 0x9000, scoped, tag = 'internal scratch']
  %s0 = inlined_call_operand.vmem [shape: bf16[2,16,512], index: 0, kind: input, shape index: {}]
  %s1 = inlined_call_operand.vmem [shape: bf16[2,512,128], index: 1, kind: input, shape index: {}]
  %s2 = inlined_call_operand.vmem [shape: f32[2,1,128], index: 2, kind: input, shape index: {}]
  %s3 = inlined_call_operand.vmem [shape: bf16[2,16,128], index: 3, kind: output, shape index: {}]
  %s4 = sld [smem:[#allocation0]]
  $region45: #{rnd_forward.4} parent=0
    _
  %s6 = ssub.s32 1, %s4
  %s7 = scalar_select 0, %s6, %s4
  loop: start=0, step=1, limit=4
  $region2: #{rnd_forward.4} parent=0 // loop_pre_header
    _
  $region3: #{rnd_forward.4} parent=0 // loop_header
    %s9 = sphi 0, %s13
    %p10 = scmp.ge.s32.totalorder %s9, 4
    %s16 = sphi 0, %s28
    %s17 = sphi 0, %s24
    %s18 = sphi 0, %s16
    %s19 = sphi 0, %s17
    %s20 = sphi 0, %s18
    %s21 = sphi 0, %s19
    %s33 = sphi 0, %s35
    %s36 = sphi 0, %s33
    %s37 = sphi 0, %s36
    %s53 = sphi 0, %s37
    %s59 = sphi 0, %s61
    %s62 = sphi 0, %s59
    %s63 = sphi 0, %s62
    %s79 = sphi 0, %s63
    %s85 = sphi 0, %s87
    %s88 = sphi 0, %s85
    %s89 = sphi 0, %s88
    %s105 = sphi 0, %s89
    %s113 = sphi 0, %s115
    %s116 = sphi 0, %s113
    %s117 = sphi 0, %s116
    %s133 = sphi 0, %s117
  $region4: #{rnd_forward.4} parent=0 // loop_header_branch
    %12 = sbr.rel (%p10) target = $region8
  $region5: #{rnd_forward.4} parent=0 // loop_body
    %s14 = ssub.s32 %s9, 1
    %s15 = ssub.s32 %s9, 2
    %s22 = sadd.s32 1, %s17
    %p23 = scmp.ge.s32.totalorder %s22, 1
    %s24 = scalar_select %p23, 0, %s22
    %s25 = sadd.s32 1, %s16
    %s26 = scalar_select %p23, %s25, %s16
    %p27 = scmp.ge.s32.totalorder %s26, 2
    %s28 = scalar_select %p27, 0, %s26
    %s29 = ssub.s32 %s16, %s28
    %s30 = ssub.s32 %s17, %s24
    %s31 = sor.u32 %s29, %s30
    %p32 = scmp.eq.s32.totalorder %s31, 0
    %s34 = sadd.s32 %s33, 1
    %s35 = scalar_select %p32, %s33, %s34
    %p38 = pneg %p32
    %p39 = scmp.eq.s32.totalorder %s9, 1
    %p40 = por %p38, %p39
    %p41 = scmp.ne.s32.totalorder %s33, %s36
    %p42 = scmp.eq.s32.totalorder %s9, 0
    %p43 = por %p41, %p42
    %p44 = scmp.ne.s32.totalorder %s33, %s36
    %p45 = scmp.eq.s32.totalorder %s14, 1
    %p46 = por %p44, %p45
    %p47 = scmp.ne.s32.totalorder %s36, %s37
    %p48 = scmp.eq.s32.totalorder %s14, 0
    %p49 = por %p47, %p48
    %p50 = scmp.ne.s32.totalorder %s36, %s37
    %p51 = scmp.eq.s32.totalorder %s15, 1
    %p52 = por %p50, %p51
    %p54 = scmp.ne.s32.totalorder %s37, %s53
    %p55 = scmp.eq.s32.totalorder %s15, 0
    %p56 = por %p54, %p55
    %s57 = ssub.s32 %s16, %s28
    %p58 = scmp.eq.s32.totalorder %s57, 0
    %s60 = sadd.s32 %s59, 1
    %s61 = scalar_select %p58, %s59, %s60
    %p64 = pneg %p58
    %p65 = scmp.eq.s32.totalorder %s9, 1
    %p66 = por %p64, %p65
    %p67 = scmp.ne.s32.totalorder %s59, %s62
    %p68 = scmp.eq.s32.totalorder %s9, 0
    %p69 = por %p67, %p68
    %p70 = scmp.ne.s32.totalorder %s59, %s62
    %p71 = scmp.eq.s32.totalorder %s14, 1
    %p72 = por %p70, %p71
    %p73 = scmp.ne.s32.totalorder %s62, %s63
    %p74 = scmp.eq.s32.totalorder %s14, 0
    %p75 = por %p73, %p74
    %p76 = scmp.ne.s32.totalorder %s62, %s63
    %p77 = scmp.eq.s32.totalorder %s15, 1
    %p78 = por %p76, %p77
    %p80 = scmp.ne.s32.totalorder %s63, %s79
    %p81 = scmp.eq.s32.totalorder %s15, 0
    %p82 = por %p80, %p81
    %s83 = ssub.s32 %s16, %s28
    %p84 = scmp.eq.s32.totalorder %s83, 0
    %s86 = sadd.s32 %s85, 1
    %s87 = scalar_select %p84, %s85, %s86
    %p90 = pneg %p84
    %p91 = scmp.eq.s32.totalorder %s9, 1
    %p92 = por %p90, %p91
    %p93 = scmp.ne.s32.totalorder %s85, %s88
    %p94 = scmp.eq.s32.totalorder %s9, 0
    %p95 = por %p93, %p94
    %p96 = scmp.ne.s32.totalorder %s85, %s88
    %p97 = scmp.eq.s32.totalorder %s14, 1
    %p98 = por %p96, %p97
    %p99 = scmp.ne.s32.totalorder %s88, %s89
    %p100 = scmp.eq.s32.totalorder %s14, 0
    %p101 = por %p99, %p100
    %p102 = scmp.ne.s32.totalorder %s88, %s89
    %p103 = scmp.eq.s32.totalorder %s15, 1
    %p104 = por %p102, %p103
    %p106 = scmp.ne.s32.totalorder %s89, %s105
    %p107 = scmp.eq.s32.totalorder %s15, 0
    %p108 = por %p106, %p107
    %s109 = ssub.s32 %s16, %s28
    %s110 = ssub.s32 %s17, %s24
    %s111 = sor.u32 %s109, %s110
    %p112 = scmp.eq.s32.totalorder %s111, 0
    %s114 = sadd.s32 %s113, 1
    %s115 = scalar_select %p112, %s113, %s114
    %p118 = pneg %p112
    %p119 = scmp.eq.s32.totalorder %s9, 1
    %p120 = por %p118, %p119
    %p121 = scmp.ne.s32.totalorder %s113, %s116
    %p122 = scmp.eq.s32.totalorder %s9, 0
    %p123 = por %p121, %p122
    %p124 = scmp.ne.s32.totalorder %s113, %s116
    %p125 = scmp.eq.s32.totalorder %s14, 1
    %p126 = por %p124, %p125
    %p127 = scmp.ne.s32.totalorder %s116, %s117
    %p128 = scmp.eq.s32.totalorder %s14, 0
    %p129 = por %p127, %p128
    %p130 = scmp.ne.s32.totalorder %s116, %s117
    %p131 = scmp.eq.s32.totalorder %s15, 1
    %p132 = por %p130, %p131
    %p134 = scmp.ne.s32.totalorder %s117, %s133
    %p135 = scmp.eq.s32.totalorder %s15, 0
    %p136 = por %p134, %p135
    %p137 = scmp.le.s32.totalorder 1, %s9
    %p138 = scmp.lt.s32.totalorder %s9, 3
    %p139 = pnand %p137, %p138
    %p140 = pneg %p139
    // Predicated region
    $region9: #{rnd_forward.4} parent=5 // pred_check
      _
    $region10: #{rnd_forward.4} parent=5 // pred_check_branch
      %142 = sbr.rel (%p139) target = $region12
    $region11: #{rnd_forward.4} parent=5 // pred_region
      %s143 = ssub.s32 %s9, 1
    $region12: #{rnd_forward.4} parent=5 // pred_fallthru
      _
    %p144 = scmp.lt.s32.totalorder %s9, 2
    // Predicated region
    $region13: #{rnd_forward.4} parent=5 // pred_check
      %p145 = pneg %p144
    $region14: #{rnd_forward.4} parent=5 // pred_check_branch
      %147 = sbr.rel (%p145) target = $region16
    $region15: #{rnd_forward.4} parent=5 // pred_region
      // Predicated region
      $region17: #{rnd_forward.4} parent=15 // pred_check
        %p148 = pneg %p43
      $region18: #{rnd_forward.4} parent=15 // pred_check_branch
        %150 = sbr.rel (%p148) target = $region20
      $region19: #{rnd_forward.4} parent=15 // pred_region
        %s151 = smul.u32 2, %s17
        %p152 = scmp.lt.s32.totalorder %s16, 1
        %s153 = scalar_select %p152, %s16, 1
        %p154 = scmp.lt.s32.totalorder %s151, 1
        %s155 = scalar_select %p154, %s151, 1
        %s156 = smul.addr %s155, 4
        %s157 = smul.addr %s153, 8
        %s158 = sadd.s32 %s156, %s157
        %s159 = smul.addr %s158, 4
        %s160 = scalar_lea.vmem %s0, %s159
        %s161 = smul.u32 2, %s17
      $region20: #{rnd_forward.4} parent=15 // pred_fallthru
        _
      // Predicated region
      $region21: #{rnd_forward.4} parent=15 // pred_check
        %p162 = pneg %p69
      $region22: #{rnd_forward.4} parent=15 // pred_check_branch
        %164 = sbr.rel (%p162) target = $region24
      $region23: #{rnd_forward.4} parent=15 // pred_region
        %p165 = scmp.lt.s32.totalorder %s16, 1
        %s166 = scalar_select %p165, %s16, 1
        %s167 = smul.addr %s166, 64
        %s168 = smul.addr %s167, 4
        %s169 = scalar_lea.vmem %s1, %s168
      $region24: #{rnd_forward.4} parent=15 // pred_fallthru
        _
      // Predicated region
      $region25: #{rnd_forward.4} parent=15 // pred_check
        %p170 = pneg %p95
      $region26: #{rnd_forward.4} parent=15 // pred_check_branch
        %172 = sbr.rel (%p170) target = $region28
      $region27: #{rnd_forward.4} parent=15 // pred_region
        %p173 = scmp.lt.s32.totalorder %s16, 1
        %s174 = scalar_select %p173, %s16, 1
        %s175 = scalar_lea.vmem %s2, %s174
      $region28: #{rnd_forward.4} parent=15 // pred_fallthru
        _
    $region16: #{rnd_forward.4} parent=5 // pred_fallthru
      _
    %p176 = scmp.le.s32.totalorder 1, %s9
    %p177 = scmp.lt.s32.totalorder %s9, 3
    %p178 = pnand %p176, %p177
    %p179 = pneg %p178
    // Predicated region
    $region29: #{rnd_forward.4} parent=5 // pred_check
      _
    $region30: #{rnd_forward.4} parent=5 // pred_check_branch
      %181 = sbr.rel (%p178) target = $region32
    $region31: #{rnd_forward.4} parent=5 // pred_region
      %s182 = ssub.s32 %s9, 1
      %s183 = smul.u32 2, %s19
      %p184 = scmp.lt.s32.totalorder %s18, 1
      %s185 = scalar_select %p184, %s18, 1
      %p186 = scmp.lt.s32.totalorder %s183, 1
      %s187 = scalar_select %p186, %s183, 1
      %s188 = smul.addr %s187, 4
      %s189 = smul.addr %s185, 8
      %s190 = sadd.s32 %s188, %s189
      %s191 = smul.addr %s190, 4
      %s192 = scalar_lea.vmem %s0, %s191
      %p193 = pneg %p49
      %p194 = pneg %p46
      %p195 = scmp.lt.s32.totalorder %s18, 1
      %s196 = scalar_select %p195, %s18, 1
      %s197 = smul.addr %s196, 64
      %s198 = smul.addr %s197, 4
      %s199 = scalar_lea.vmem %s1, %s198
      %p200 = pneg %p75
      %p201 = pneg %p72
      %p202 = scmp.lt.s32.totalorder %s18, 1
      %s203 = scalar_select %p202, %s18, 1
      %s204 = scalar_lea.vmem %s2, %s203
      %p205 = pneg %p101
      %p206 = pneg %p98
      %p207 = pneg %p129
      %p208 = pneg %p126
      %s209 = smul.u32 2, %s19
      %p210 = scmp.lt.s32.totalorder %s18, 1
      %s211 = scalar_select %p210, %s18, 1
      %p212 = scmp.lt.s32.totalorder %s209, 1
      %s213 = scalar_select %p212, %s209, 1
      %s214 = smul.addr %s211, 2
      %s215 = sadd.s32 %s213, %s214
      %s216 = smul.addr %s215, 4
      %s217 = scalar_lea.vmem %s3, %s216
      %s218 = smul.u32 2, %s19
      %p219 = scmp.lt.s32.totalorder %s18, 1
      %s220 = scalar_select %p219, %s18, 1
      %p221 = scmp.lt.s32.totalorder %s218, 1
      %s222 = scalar_select %p221, %s218, 1
      %s223 = smul.addr %s222, 4
      %s224 = smul.addr %s220, 8
      %s225 = sadd.s32 %s223, %s224
      %s226 = smul.addr %s225, 4
      %s227 = scalar_lea.vmem %s0, %s226
      %s228 = smul.u32 2, %s19
      %p229 = scmp.lt.s32.totalorder %s18, 1
      %s230 = scalar_select %p229, %s18, 1
      %s231 = smul.addr %s230, 64
      %s232 = smul.addr %s231, 4
      %s233 = scalar_lea.vmem %s1, %s232
      %p234 = scmp.lt.s32.totalorder %s18, 1
      %s235 = scalar_select %p234, %s18, 1
      %s236 = scalar_lea.vmem %s2, %s235
      %s237 = smul.u32 2, %s19
      %p238 = scmp.lt.s32.totalorder %s18, 1
      %s239 = scalar_select %p238, %s18, 1
      %p240 = scmp.lt.s32.totalorder %s237, 1
      %s241 = scalar_select %p240, %s237, 1
      %s242 = smul.addr %s239, 2
      %s243 = sadd.s32 %s241, %s242
      %s244 = smul.addr %s243, 4
      %s245 = scalar_lea.vmem %s3, %s244
      %s246 = smul.u32 2, %s19
      %v247 = vld [vmem:[%s227] sm:$0xff]
      %v248 = vld [vmem:[%s227 + $0x8] sm:$0xff]
      %v249 = vld [vmem:[%s227 + $0x10] sm:$0xff]
      %v250 = vld [vmem:[%s227 + $0x18] sm:$0xff]
      %v251 = vld [vmem:[%s233] sm:$0xf]
      %v252 = vld [vmem:[%s233 + $0x4] sm:$0xf]
      %v253 = vld [vmem:[%s233 + $0x8] sm:$0xf]
      %v254 = vld [vmem:[%s233 + $0xc] sm:$0xf]
      %v255 = vld [vmem:[%s233 + $0x10] sm:$0xf]
      %v256 = vld [vmem:[%s233 + $0x14] sm:$0xf]
      %v257 = vld [vmem:[%s233 + $0x18] sm:$0xf]
      %v258 = vld [vmem:[%s233 + $0x1c] sm:$0xf]
      %v259 = vld [vmem:[%s233 + $0x20] sm:$0xf]
      %v260 = vld [vmem:[%s233 + $0x24] sm:$0xf]
      %v261 = vld [vmem:[%s233 + $0x28] sm:$0xf]
      %v262 = vld [vmem:[%s233 + $0x2c] sm:$0xf]
      %v263 = vld [vmem:[%s233 + $0x30] sm:$0xf]
      %v264 = vld [vmem:[%s233 + $0x34] sm:$0xf]
      %v265 = vld [vmem:[%s233 + $0x38] sm:$0xf]
      %v266 = vld [vmem:[%s233 + $0x3c] sm:$0xf]
      %v267 = vld [vmem:[%s233 + $0x40] sm:$0xf]
      %v268 = vld [vmem:[%s233 + $0x44] sm:$0xf]
      %v269 = vld [vmem:[%s233 + $0x48] sm:$0xf]
      %v270 = vld [vmem:[%s233 + $0x4c] sm:$0xf]
      %v271 = vld [vmem:[%s233 + $0x50] sm:$0xf]
      %v272 = vld [vmem:[%s233 + $0x54] sm:$0xf]
      %v273 = vld [vmem:[%s233 + $0x58] sm:$0xf]
      %v274 = vld [vmem:[%s233 + $0x5c] sm:$0xf]
      %v275 = vld [vmem:[%s233 + $0x60] sm:$0xf]
      %v276 = vld [vmem:[%s233 + $0x64] sm:$0xf]
      %v277 = vld [vmem:[%s233 + $0x68] sm:$0xf]
      %v278 = vld [vmem:[%s233 + $0x6c] sm:$0xf]
      %v279 = vld [vmem:[%s233 + $0x70] sm:$0xf]
      %v280 = vld [vmem:[%s233 + $0x74] sm:$0xf]
      %v281 = vld [vmem:[%s233 + $0x78] sm:$0xf]
      %v282 = vld [vmem:[%s233 + $0x7c] sm:$0xf]
      %v283 = vld [vmem:[%s233 + $0x80] sm:$0xf]
      %v284 = vld [vmem:[%s233 + $0x84] sm:$0xf]
      %v285 = vld [vmem:[%s233 + $0x88] sm:$0xf]
      %v286 = vld [vmem:[%s233 + $0x8c] sm:$0xf]
      %v287 = vld [vmem:[%s233 + $0x90] sm:$0xf]
      %v288 = vld [vmem:[%s233 + $0x94] sm:$0xf]
      %v289 = vld [vmem:[%s233 + $0x98] sm:$0xf]
      %v290 = vld [vmem:[%s233 + $0x9c] sm:$0xf]
      %v291 = vld [vmem:[%s233 + $0xa0] sm:$0xf]
      %v292 = vld [vmem:[%s233 + $0xa4] sm:$0xf]
      %v293 = vld [vmem:[%s233 + $0xa8] sm:$0xf]
      %v294 = vld [vmem:[%s233 + $0xac] sm:$0xf]
      %v295 = vld [vmem:[%s233 + $0xb0] sm:$0xf]
      %v296 = vld [vmem:[%s233 + $0xb4] sm:$0xf]
      %v297 = vld [vmem:[%s233 + $0xb8] sm:$0xf]
      %v298 = vld [vmem:[%s233 + $0xbc] sm:$0xf]
      %v299 = vld [vmem:[%s233 + $0xc0] sm:$0xf]
      %v300 = vld [vmem:[%s233 + $0xc4] sm:$0xf]
      %v301 = vld [vmem:[%s233 + $0xc8] sm:$0xf]
      %v302 = vld [vmem:[%s233 + $0xcc] sm:$0xf]
      %v303 = vld [vmem:[%s233 + $0xd0] sm:$0xf]
      %v304 = vld [vmem:[%s233 + $0xd4] sm:$0xf]
      %v305 = vld [vmem:[%s233 + $0xd8] sm:$0xf]
      %v306 = vld [vmem:[%s233 + $0xdc] sm:$0xf]
      %v307 = vld [vmem:[%s233 + $0xe0] sm:$0xf]
      %v308 = vld [vmem:[%s233 + $0xe4] sm:$0xf]
      %v309 = vld [vmem:[%s233 + $0xe8] sm:$0xf]
      %v310 = vld [vmem:[%s233 + $0xec] sm:$0xf]
      %v311 = vld [vmem:[%s233 + $0xf0] sm:$0xf]
      %v312 = vld [vmem:[%s233 + $0xf4] sm:$0xf]
      %v313 = vld [vmem:[%s233 + $0xf8] sm:$0xf]
      %v314 = vld [vmem:[%s233 + $0xfc] sm:$0xf]
      %v315 = vld [vmem:[%s236] sm:$0x1]
      %v317 = vperm.slane %v315, 0
      %v323 = vunpack.c.l.b16 %v247
      %v324 = vunpack.c.h.b16 %v247
      %v325 = vunpack.c.l.b16 %v248
      %v326 = vunpack.c.h.b16 %v248
      %v327 = vunpack.c.l.b16 %v249
      %v328 = vunpack.c.h.b16 %v249
      %v329 = vunpack.c.l.b16 %v250
      %v330 = vunpack.c.h.b16 %v250
      %v331 = vpack.c.b16 %v327, %v323
      %v332 = vpack.c.b16 %v328, %v324
      %v333 = vpack.c.b16 %v329, %v325
      %v334 = vpack.c.b16 %v330, %v326
      %v403 = vunpack.c.l.b16 %v251
      %v404 = vunpack.c.l.b16 %v252
      %v405 = vunpack.c.l.b16 %v253
      %v406 = vunpack.c.l.b16 %v254
      %v407 = vunpack.c.l.b16 %v255
      %v408 = vunpack.c.l.b16 %v256
      %v409 = vunpack.c.l.b16 %v257
      %v410 = vunpack.c.l.b16 %v258
      %v411 = vunpack.c.l.b16 %v259
      %v412 = vunpack.c.l.b16 %v260
      %v413 = vunpack.c.l.b16 %v261
      %v414 = vunpack.c.l.b16 %v262
      %v415 = vunpack.c.l.b16 %v263
      %v416 = vunpack.c.l.b16 %v264
      %v417 = vunpack.c.l.b16 %v265
      %v418 = vunpack.c.l.b16 %v266
      %v419 = vunpack.c.l.b16 %v267
      %v420 = vunpack.c.l.b16 %v268
      %v421 = vunpack.c.l.b16 %v269
      %v422 = vunpack.c.l.b16 %v270
      %v423 = vunpack.c.l.b16 %v271
      %v424 = vunpack.c.l.b16 %v272
      %v425 = vunpack.c.l.b16 %v273
      %v426 = vunpack.c.l.b16 %v274
      %v427 = vunpack.c.l.b16 %v275
      %v428 = vunpack.c.l.b16 %v276
      %v429 = vunpack.c.l.b16 %v277
      %v430 = vunpack.c.l.b16 %v278
      %v431 = vunpack.c.l.b16 %v279
      %v432 = vunpack.c.l.b16 %v280
      %v433 = vunpack.c.l.b16 %v281
      %v434 = vunpack.c.l.b16 %v282
      %v435 = vunpack.c.l.b16 %v283
      %v436 = vunpack.c.l.b16 %v284
      %v437 = vunpack.c.l.b16 %v285
      %v438 = vunpack.c.l.b16 %v286
      %v439 = vunpack.c.l.b16 %v287
      %v440 = vunpack.c.l.b16 %v288
      %v441 = vunpack.c.l.b16 %v289
      %v442 = vunpack.c.l.b16 %v290
      %v443 = vunpack.c.l.b16 %v291
      %v444 = vunpack.c.l.b16 %v292
      %v445 = vunpack.c.l.b16 %v293
      %v446 = vunpack.c.l.b16 %v294
      %v447 = vunpack.c.l.b16 %v295
      %v448 = vunpack.c.l.b16 %v296
      %v449 = vunpack.c.l.b16 %v297
      %v450 = vunpack.c.l.b16 %v298
      %v451 = vunpack.c.l.b16 %v299
      %v452 = vunpack.c.l.b16 %v300
      %v453 = vunpack.c.l.b16 %v301
      %v454 = vunpack.c.l.b16 %v302
      %v455 = vunpack.c.l.b16 %v303
      %v456 = vunpack.c.l.b16 %v304
      %v457 = vunpack.c.l.b16 %v305
      %v458 = vunpack.c.l.b16 %v306
      %v459 = vunpack.c.l.b16 %v307
      %v460 = vunpack.c.l.b16 %v308
      %v461 = vunpack.c.l.b16 %v309
      %v462 = vunpack.c.l.b16 %v310
      %v463 = vunpack.c.l.b16 %v311
      %v464 = vunpack.c.l.b16 %v312
      %v465 = vunpack.c.l.b16 %v313
      %v466 = vunpack.c.l.b16 %v314
      %v467 = vpack.c.b16 %v404, %v403
      %v468 = vpack.c.b16 %v406, %v405
      %v469 = vpack.c.b16 %v408, %v407
      %v470 = vpack.c.b16 %v410, %v409
      %v471 = vpack.c.b16 %v412, %v411
      %v472 = vpack.c.b16 %v414, %v413
      %v473 = vpack.c.b16 %v416, %v415
      %v474 = vpack.c.b16 %v418, %v417
      %v475 = vpack.c.b16 %v420, %v419
      %v476 = vpack.c.b16 %v422, %v421
      %v477 = vpack.c.b16 %v424, %v423
      %v478 = vpack.c.b16 %v426, %v425
      %v479 = vpack.c.b16 %v428, %v427
      %v480 = vpack.c.b16 %v430, %v429
      %v481 = vpack.c.b16 %v432, %v431
      %v482 = vpack.c.b16 %v434, %v433
      %v483 = vpack.c.b16 %v436, %v435
      %v484 = vpack.c.b16 %v438, %v437
      %v485 = vpack.c.b16 %v440, %v439
      %v486 = vpack.c.b16 %v442, %v441
      %v487 = vpack.c.b16 %v444, %v443
      %v488 = vpack.c.b16 %v446, %v445
      %v489 = vpack.c.b16 %v448, %v447
      %v490 = vpack.c.b16 %v450, %v449
      %v491 = vpack.c.b16 %v452, %v451
      %v492 = vpack.c.b16 %v454, %v453
      %v493 = vpack.c.b16 %v456, %v455
      %v494 = vpack.c.b16 %v458, %v457
      %v495 = vpack.c.b16 %v460, %v459
      %v496 = vpack.c.b16 %v462, %v461
      %v497 = vpack.c.b16 %v464, %v463
      %v498 = vpack.c.b16 %v466, %v465
      %531 = vmatpush.bf16.msra.mxu0 %v474
      %532 = vmatpush.bf16.msra.mxu0 %v473
      %533 = vmatpush.bf16.msra.mxu0 %v472
      %534 = vmatpush.bf16.msra.mxu0 %v471
      %535 = vmatpush.bf16.msra.mxu0 %v470
      %536 = vmatpush.bf16.msra.mxu0 %v469
      %537 = vmatpush.bf16.msra.mxu0 %v468
      %538 = vmatpush.bf16.msra.mxu0 %v467
      %539 = vmatmul.bf16.gmra.mxu0 %v331
      %v540 = vpop.f32.mrf.mxu0
      %v541 = vadd.f32 %v317, %v540
      %v542 = vpop.f32.mrf.mxu0
      %v543 = vadd.f32 %v317, %v542
      %544 = vdwg.mxu0
      %545 = vmatpush.bf16.msra.mxu0 %v482
      %546 = vmatpush.bf16.msra.mxu0 %v481
      %547 = vmatpush.bf16.msra.mxu0 %v480
      %548 = vmatpush.bf16.msra.mxu0 %v479
      %549 = vmatpush.bf16.msra.mxu0 %v478
      %550 = vmatpush.bf16.msra.mxu0 %v477
      %551 = vmatpush.bf16.msra.mxu0 %v476
      %552 = vmatpush.bf16.msra.mxu0 %v475
      %553 = vmatmul.bf16.gmra.mxu0 %v332
      %v554 = vpop.f32.mrf.mxu0
      %v555 = vadd.f32 %v541, %v554
      %v556 = vpop.f32.mrf.mxu0
      %v557 = vadd.f32 %v543, %v556
      %558 = vdwg.mxu0
      %559 = vmatpush.bf16.msra.mxu0 %v490
      %560 = vmatpush.bf16.msra.mxu0 %v489
      %561 = vmatpush.bf16.msra.mxu0 %v488
      %562 = vmatpush.bf16.msra.mxu0 %v487
      %563 = vmatpush.bf16.msra.mxu0 %v486
      %564 = vmatpush.bf16.msra.mxu0 %v485
      %565 = vmatpush.bf16.msra.mxu0 %v484
      %566 = vmatpush.bf16.msra.mxu0 %v483
      %567 = vmatmul.bf16.gmra.mxu0 %v333
      %v568 = vpop.f32.mrf.mxu0
      %v569 = vadd.f32 %v555, %v568
      %v570 = vpop.f32.mrf.mxu0
      %v571 = vadd.f32 %v557, %v570
      %572 = vdwg.mxu0
      %573 = vmatpush.bf16.msra.mxu0 %v498
      %574 = vmatpush.bf16.msra.mxu0 %v497
      %575 = vmatpush.bf16.msra.mxu0 %v496
      %576 = vmatpush.bf16.msra.mxu0 %v495
      %577 = vmatpush.bf16.msra.mxu0 %v494
      %578 = vmatpush.bf16.msra.mxu0 %v493
      %579 = vmatpush.bf16.msra.mxu0 %v492
      %580 = vmatpush.bf16.msra.mxu0 %v491
      %581 = vmatmul.bf16.gmra.mxu0 %v334
      %v582 = vpop.f32.mrf.mxu0
      %v583 = vadd.f32 %v569, %v582
      %v584 = vpop.f32.mrf.mxu0
      %v585 = vadd.f32 %v571, %v584
      %586 = vdwg.mxu0
      %v587 = vmax.f32 %v583, 0.0
      %v588 = vmax.f32 %v585, 0.0
      %v589 = vpack.c.bf16 %v587, %v587
      %v590 = vpack.c.bf16 %v588, %v588
      %591 = vst [vmem:[%s245] sm:$0xf] %v589
      %592 = vst [vmem:[%s245 + $0x4] sm:$0xf] %v590
      %s593 = smul.u32 2, %s19
      %p594 = scmp.lt.s32.totalorder %s18, 1
      %s595 = scalar_select %p594, %s18, 1
      %p596 = scmp.lt.s32.totalorder %s593, 1
      %s597 = scalar_select %p596, %s593, 1
      %s598 = smul.addr %s595, 2
      %s599 = sadd.s32 %s597, %s598
      %s600 = smul.addr %s599, 4
      %s601 = scalar_lea.vmem %s3, %s600
      // Predicated region
      $region33: #{rnd_forward.4} parent=31 // pred_check
        %p602 = pneg %p126
      $region34: #{rnd_forward.4} parent=31 // pred_check_branch
        %604 = sbr.rel (%p602) target = $region36
      $region35: #{rnd_forward.4} parent=31 // pred_region
        %s605 = smul.u32 2, %s19
      $region36: #{rnd_forward.4} parent=31 // pred_fallthru
        _
    $region32: #{rnd_forward.4} parent=5 // pred_fallthru
      _
    %p606 = scmp.le.s32.totalorder 2, %s9
    // Predicated region
    $region37: #{rnd_forward.4} parent=5 // pred_check
      %p607 = pneg %p606
    $region38: #{rnd_forward.4} parent=5 // pred_check_branch
      %609 = sbr.rel (%p607) target = $region40
    $region39: #{rnd_forward.4} parent=5 // pred_region
      %s610 = ssub.s32 %s9, 2
      // Predicated region
      $region41: #{rnd_forward.4} parent=39 // pred_check
        %p611 = pneg %p132
      $region42: #{rnd_forward.4} parent=39 // pred_check_branch
        %613 = sbr.rel (%p611) target = $region44
      $region43: #{rnd_forward.4} parent=39 // pred_region
        %s614 = smul.u32 2, %s21
        %p615 = scmp.lt.s32.totalorder %s20, 1
        %s616 = scalar_select %p615, %s20, 1
        %p617 = scmp.lt.s32.totalorder %s614, 1
        %s618 = scalar_select %p617, %s614, 1
        %s619 = smul.addr %s616, 2
        %s620 = sadd.s32 %s618, %s619
        %s621 = smul.addr %s620, 4
        %s622 = scalar_lea.vmem %s3, %s621
      $region44: #{rnd_forward.4} parent=39 // pred_fallthru
        _
    $region40: #{rnd_forward.4} parent=5 // pred_fallthru
      _
  $region6: #{rnd_forward.4} parent=0 // loop_footer
    %s13 = sadd.s32 1, %s9
  $region7: #{rnd_forward.4} parent=0 // loop_footer_branch
    %8 = sbr.rel target = $region3
  $region8: #{rnd_forward.4} parent=0 // loop_exit
    _

// kernel: rnd_forward.5
$region0: #{rnd_forward.5}
  #allocation0 [shape = 'u32[]', space=smem, size = 0x4, offset = 0x4, fixed_abs, tag = 'smem constant byte address 0x4 - core index']
  #allocation1 [shape = 'u32[72,128]{1,0:T(1,128)}', space=vmem, size = 0x9000, scoped, tag = 'internal scratch']
  %s0 = inlined_call_operand.vmem [shape: bf16[2,16,256], index: 0, kind: input, shape index: {}]
  %s1 = inlined_call_operand.vmem [shape: bf16[2,256,512], index: 1, kind: input, shape index: {}]
  %s2 = inlined_call_operand.vmem [shape: f32[2,1,512], index: 2, kind: input, shape index: {}]
  %s3 = inlined_call_operand.vmem [shape: f32[2,16,512], index: 3, kind: output, shape index: {}]
  %s4 = sld [smem:[#allocation0]]
  $region45: #{rnd_forward.5} parent=0
    _
  %s6 = ssub.s32 1, %s4
  %s7 = scalar_select 0, %s6, %s4
  loop: start=0, step=1, limit=4
  $region2: #{rnd_forward.5} parent=0 // loop_pre_header
    _
  $region3: #{rnd_forward.5} parent=0 // loop_header
    %s9 = sphi 0, %s13
    %p10 = scmp.ge.s32.totalorder %s9, 4
    %s16 = sphi 0, %s28
    %s17 = sphi 0, %s24
    %s18 = sphi 0, %s16
    %s19 = sphi 0, %s17
    %s20 = sphi 0, %s18
    %s21 = sphi 0, %s19
    %s33 = sphi 0, %s35
    %s36 = sphi 0, %s33
    %s37 = sphi 0, %s36
    %s53 = sphi 0, %s37
    %s59 = sphi 0, %s61
    %s62 = sphi 0, %s59
    %s63 = sphi 0, %s62
    %s79 = sphi 0, %s63
    %s85 = sphi 0, %s87
    %s88 = sphi 0, %s85
    %s89 = sphi 0, %s88
    %s105 = sphi 0, %s89
    %s113 = sphi 0, %s115
    %s116 = sphi 0, %s113
    %s117 = sphi 0, %s116
    %s133 = sphi 0, %s117
  $region4: #{rnd_forward.5} parent=0 // loop_header_branch
    %12 = sbr.rel (%p10) target = $region8
  $region5: #{rnd_forward.5} parent=0 // loop_body
    %s14 = ssub.s32 %s9, 1
    %s15 = ssub.s32 %s9, 2
    %s22 = sadd.s32 1, %s17
    %p23 = scmp.ge.s32.totalorder %s22, 1
    %s24 = scalar_select %p23, 0, %s22
    %s25 = sadd.s32 1, %s16
    %s26 = scalar_select %p23, %s25, %s16
    %p27 = scmp.ge.s32.totalorder %s26, 2
    %s28 = scalar_select %p27, 0, %s26
    %s29 = ssub.s32 %s16, %s28
    %s30 = ssub.s32 %s17, %s24
    %s31 = sor.u32 %s29, %s30
    %p32 = scmp.eq.s32.totalorder %s31, 0
    %s34 = sadd.s32 %s33, 1
    %s35 = scalar_select %p32, %s33, %s34
    %p38 = pneg %p32
    %p39 = scmp.eq.s32.totalorder %s9, 1
    %p40 = por %p38, %p39
    %p41 = scmp.ne.s32.totalorder %s33, %s36
    %p42 = scmp.eq.s32.totalorder %s9, 0
    %p43 = por %p41, %p42
    %p44 = scmp.ne.s32.totalorder %s33, %s36
    %p45 = scmp.eq.s32.totalorder %s14, 1
    %p46 = por %p44, %p45
    %p47 = scmp.ne.s32.totalorder %s36, %s37
    %p48 = scmp.eq.s32.totalorder %s14, 0
    %p49 = por %p47, %p48
    %p50 = scmp.ne.s32.totalorder %s36, %s37
    %p51 = scmp.eq.s32.totalorder %s15, 1
    %p52 = por %p50, %p51
    %p54 = scmp.ne.s32.totalorder %s37, %s53
    %p55 = scmp.eq.s32.totalorder %s15, 0
    %p56 = por %p54, %p55
    %s57 = ssub.s32 %s16, %s28
    %p58 = scmp.eq.s32.totalorder %s57, 0
    %s60 = sadd.s32 %s59, 1
    %s61 = scalar_select %p58, %s59, %s60
    %p64 = pneg %p58
    %p65 = scmp.eq.s32.totalorder %s9, 1
    %p66 = por %p64, %p65
    %p67 = scmp.ne.s32.totalorder %s59, %s62
    %p68 = scmp.eq.s32.totalorder %s9, 0
    %p69 = por %p67, %p68
    %p70 = scmp.ne.s32.totalorder %s59, %s62
    %p71 = scmp.eq.s32.totalorder %s14, 1
    %p72 = por %p70, %p71
    %p73 = scmp.ne.s32.totalorder %s62, %s63
    %p74 = scmp.eq.s32.totalorder %s14, 0
    %p75 = por %p73, %p74
    %p76 = scmp.ne.s32.totalorder %s62, %s63
    %p77 = scmp.eq.s32.totalorder %s15, 1
    %p78 = por %p76, %p77
    %p80 = scmp.ne.s32.totalorder %s63, %s79
    %p81 = scmp.eq.s32.totalorder %s15, 0
    %p82 = por %p80, %p81
    %s83 = ssub.s32 %s16, %s28
    %p84 = scmp.eq.s32.totalorder %s83, 0
    %s86 = sadd.s32 %s85, 1
    %s87 = scalar_select %p84, %s85, %s86
    %p90 = pneg %p84
    %p91 = scmp.eq.s32.totalorder %s9, 1
    %p92 = por %p90, %p91
    %p93 = scmp.ne.s32.totalorder %s85, %s88
    %p94 = scmp.eq.s32.totalorder %s9, 0
    %p95 = por %p93, %p94
    %p96 = scmp.ne.s32.totalorder %s85, %s88
    %p97 = scmp.eq.s32.totalorder %s14, 1
    %p98 = por %p96, %p97
    %p99 = scmp.ne.s32.totalorder %s88, %s89
    %p100 = scmp.eq.s32.totalorder %s14, 0
    %p101 = por %p99, %p100
    %p102 = scmp.ne.s32.totalorder %s88, %s89
    %p103 = scmp.eq.s32.totalorder %s15, 1
    %p104 = por %p102, %p103
    %p106 = scmp.ne.s32.totalorder %s89, %s105
    %p107 = scmp.eq.s32.totalorder %s15, 0
    %p108 = por %p106, %p107
    %s109 = ssub.s32 %s16, %s28
    %s110 = ssub.s32 %s17, %s24
    %s111 = sor.u32 %s109, %s110
    %p112 = scmp.eq.s32.totalorder %s111, 0
    %s114 = sadd.s32 %s113, 1
    %s115 = scalar_select %p112, %s113, %s114
    %p118 = pneg %p112
    %p119 = scmp.eq.s32.totalorder %s9, 1
    %p120 = por %p118, %p119
    %p121 = scmp.ne.s32.totalorder %s113, %s116
    %p122 = scmp.eq.s32.totalorder %s9, 0
    %p123 = por %p121, %p122
    %p124 = scmp.ne.s32.totalorder %s113, %s116
    %p125 = scmp.eq.s32.totalorder %s14, 1
    %p126 = por %p124, %p125
    %p127 = scmp.ne.s32.totalorder %s116, %s117
    %p128 = scmp.eq.s32.totalorder %s14, 0
    %p129 = por %p127, %p128
    %p130 = scmp.ne.s32.totalorder %s116, %s117
    %p131 = scmp.eq.s32.totalorder %s15, 1
    %p132 = por %p130, %p131
    %p134 = scmp.ne.s32.totalorder %s117, %s133
    %p135 = scmp.eq.s32.totalorder %s15, 0
    %p136 = por %p134, %p135
    %p137 = scmp.le.s32.totalorder 1, %s9
    %p138 = scmp.lt.s32.totalorder %s9, 3
    %p139 = pnand %p137, %p138
    %p140 = pneg %p139
    // Predicated region
    $region9: #{rnd_forward.5} parent=5 // pred_check
      _
    $region10: #{rnd_forward.5} parent=5 // pred_check_branch
      %142 = sbr.rel (%p139) target = $region12
    $region11: #{rnd_forward.5} parent=5 // pred_region
      %s143 = ssub.s32 %s9, 1
    $region12: #{rnd_forward.5} parent=5 // pred_fallthru
      _
    %p144 = scmp.lt.s32.totalorder %s9, 2
    // Predicated region
    $region13: #{rnd_forward.5} parent=5 // pred_check
      %p145 = pneg %p144
    $region14: #{rnd_forward.5} parent=5 // pred_check_branch
      %147 = sbr.rel (%p145) target = $region16
    $region15: #{rnd_forward.5} parent=5 // pred_region
      // Predicated region
      $region17: #{rnd_forward.5} parent=15 // pred_check
        %p148 = pneg %p43
      $region18: #{rnd_forward.5} parent=15 // pred_check_branch
        %150 = sbr.rel (%p148) target = $region20
      $region19: #{rnd_forward.5} parent=15 // pred_region
        %s151 = smul.u32 2, %s17
        %p152 = scmp.lt.s32.totalorder %s16, 1
        %s153 = scalar_select %p152, %s16, 1
        %p154 = scmp.lt.s32.totalorder %s151, 1
        %s155 = scalar_select %p154, %s151, 1
        %s156 = smul.addr %s155, 2
        %s157 = smul.addr %s153, 4
        %s158 = sadd.s32 %s156, %s157
        %s159 = smul.addr %s158, 4
        %s160 = scalar_lea.vmem %s0, %s159
        %s161 = smul.u32 2, %s17
      $region20: #{rnd_forward.5} parent=15 // pred_fallthru
        _
      // Predicated region
      $region21: #{rnd_forward.5} parent=15 // pred_check
        %p162 = pneg %p69
      $region22: #{rnd_forward.5} parent=15 // pred_check_branch
        %164 = sbr.rel (%p162) target = $region24
      $region23: #{rnd_forward.5} parent=15 // pred_region
        %p165 = scmp.lt.s32.totalorder %s16, 1
        %s166 = scalar_select %p165, %s16, 1
        %s167 = smul.addr %s166, 128
        %s168 = smul.addr %s167, 4
        %s169 = scalar_lea.vmem %s1, %s168
      $region24: #{rnd_forward.5} parent=15 // pred_fallthru
        _
      // Predicated region
      $region25: #{rnd_forward.5} parent=15 // pred_check
        %p170 = pneg %p95
      $region26: #{rnd_forward.5} parent=15 // pred_check_branch
        %172 = sbr.rel (%p170) target = $region28
      $region27: #{rnd_forward.5} parent=15 // pred_region
        %p173 = scmp.lt.s32.totalorder %s16, 1
        %s174 = scalar_select %p173, %s16, 1
        %s175 = smul.addr %s174, 4
        %s176 = scalar_lea.vmem %s2, %s175
      $region28: #{rnd_forward.5} parent=15 // pred_fallthru
        _
    $region16: #{rnd_forward.5} parent=5 // pred_fallthru
      _
    %p177 = scmp.le.s32.totalorder 1, %s9
    %p178 = scmp.lt.s32.totalorder %s9, 3
    %p179 = pnand %p177, %p178
    %p180 = pneg %p179
    // Predicated region
    $region29: #{rnd_forward.5} parent=5 // pred_check
      _
    $region30: #{rnd_forward.5} parent=5 // pred_check_branch
      %182 = sbr.rel (%p179) target = $region32
    $region31: #{rnd_forward.5} parent=5 // pred_region
      %s183 = ssub.s32 %s9, 1
      %s184 = smul.u32 2, %s19
      %p185 = scmp.lt.s32.totalorder %s18, 1
      %s186 = scalar_select %p185, %s18, 1
      %p187 = scmp.lt.s32.totalorder %s184, 1
      %s188 = scalar_select %p187, %s184, 1
      %s189 = smul.addr %s188, 2
      %s190 = smul.addr %s186, 4
      %s191 = sadd.s32 %s189, %s190
      %s192 = smul.addr %s191, 4
      %s193 = scalar_lea.vmem %s0, %s192
      %p194 = pneg %p49
      %p195 = pneg %p46
      %p196 = scmp.lt.s32.totalorder %s18, 1
      %s197 = scalar_select %p196, %s18, 1
      %s198 = smul.addr %s197, 128
      %s199 = smul.addr %s198, 4
      %s200 = scalar_lea.vmem %s1, %s199
      %p201 = pneg %p75
      %p202 = pneg %p72
      %p203 = scmp.lt.s32.totalorder %s18, 1
      %s204 = scalar_select %p203, %s18, 1
      %s205 = smul.addr %s204, 4
      %s206 = scalar_lea.vmem %s2, %s205
      %p207 = pneg %p101
      %p208 = pneg %p98
      %p209 = pneg %p129
      %p210 = pneg %p126
      %s211 = smul.u32 2, %s19
      %p212 = scmp.lt.s32.totalorder %s18, 1
      %s213 = scalar_select %p212, %s18, 1
      %p214 = scmp.lt.s32.totalorder %s211, 1
      %s215 = scalar_select %p214, %s211, 1
      %s216 = smul.addr %s215, 4
      %s217 = smul.addr %s213, 8
      %s218 = sadd.s32 %s216, %s217
      %s219 = smul.addr %s218, 8
      %s220 = scalar_lea.vmem %s3, %s219
      %s221 = smul.u32 2, %s19
      %p222 = scmp.lt.s32.totalorder %s18, 1
      %s223 = scalar_select %p222, %s18, 1
      %p224 = scmp.lt.s32.totalorder %s221, 1
      %s225 = scalar_select %p224, %s221, 1
      %s226 = smul.addr %s225, 2
      %s227 = smul.addr %s223, 4
      %s228 = sadd.s32 %s226, %s227
      %s229 = smul.addr %s228, 4
      %s230 = scalar_lea.vmem %s0, %s229
      %s231 = smul.u32 2, %s19
      %p232 = scmp.lt.s32.totalorder %s18, 1
      %s233 = scalar_select %p232, %s18, 1
      %s234 = smul.addr %s233, 128
      %s235 = smul.addr %s234, 4
      %s236 = scalar_lea.vmem %s1, %s235
      %p237 = scmp.lt.s32.totalorder %s18, 1
      %s238 = scalar_select %p237, %s18, 1
      %s239 = smul.addr %s238, 4
      %s240 = scalar_lea.vmem %s2, %s239
      %s241 = smul.u32 2, %s19
      %p242 = scmp.lt.s32.totalorder %s18, 1
      %s243 = scalar_select %p242, %s18, 1
      %p244 = scmp.lt.s32.totalorder %s241, 1
      %s245 = scalar_select %p244, %s241, 1
      %s246 = smul.addr %s245, 4
      %s247 = smul.addr %s243, 8
      %s248 = sadd.s32 %s246, %s247
      %s249 = smul.addr %s248, 8
      %s250 = scalar_lea.vmem %s3, %s249
      %s251 = smul.u32 2, %s19
      %v252 = vld [vmem:[%s230] sm:$0xff]
      %v253 = vld [vmem:[%s230 + $0x8] sm:$0xff]
      %v254 = vld [vmem:[%s236] sm:$0xff]
      %v255 = vld [vmem:[%s236 + $0x8] sm:$0xff]
      %v256 = vld [vmem:[%s236 + $0x10] sm:$0xff]
      %v257 = vld [vmem:[%s236 + $0x18] sm:$0xff]
      %v258 = vld [vmem:[%s236 + $0x20] sm:$0xff]
      %v259 = vld [vmem:[%s236 + $0x28] sm:$0xff]
      %v260 = vld [vmem:[%s236 + $0x30] sm:$0xff]
      %v261 = vld [vmem:[%s236 + $0x38] sm:$0xff]
      %v262 = vld [vmem:[%s236 + $0x40] sm:$0xff]
      %v263 = vld [vmem:[%s236 + $0x48] sm:$0xff]
      %v264 = vld [vmem:[%s236 + $0x50] sm:$0xff]
      %v265 = vld [vmem:[%s236 + $0x58] sm:$0xff]
      %v266 = vld [vmem:[%s236 + $0x60] sm:$0xff]
      %v267 = vld [vmem:[%s236 + $0x68] sm:$0xff]
      %v268 = vld [vmem:[%s236 + $0x70] sm:$0xff]
      %v269 = vld [vmem:[%s236 + $0x78] sm:$0xff]
      %v270 = vld [vmem:[%s236 + $0x80] sm:$0xff]
      %v271 = vld [vmem:[%s236 + $0x88] sm:$0xff]
      %v272 = vld [vmem:[%s236 + $0x90] sm:$0xff]
      %v273 = vld [vmem:[%s236 + $0x98] sm:$0xff]
      %v274 = vld [vmem:[%s236 + $0xa0] sm:$0xff]
      %v275 = vld [vmem:[%s236 + $0xa8] sm:$0xff]
      %v276 = vld [vmem:[%s236 + $0xb0] sm:$0xff]
      %v277 = vld [vmem:[%s236 + $0xb8] sm:$0xff]
      %v278 = vld [vmem:[%s236 + $0xc0] sm:$0xff]
      %v279 = vld [vmem:[%s236 + $0xc8] sm:$0xff]
      %v280 = vld [vmem:[%s236 + $0xd0] sm:$0xff]
      %v281 = vld [vmem:[%s236 + $0xd8] sm:$0xff]
      %v282 = vld [vmem:[%s236 + $0xe0] sm:$0xff]
      %v283 = vld [vmem:[%s236 + $0xe8] sm:$0xff]
      %v284 = vld [vmem:[%s236 + $0xf0] sm:$0xff]
      %v285 = vld [vmem:[%s236 + $0xf8] sm:$0xff]
      %v286 = vld [vmem:[%s236 + $0x100] sm:$0xff]
      %v287 = vld [vmem:[%s236 + $0x108] sm:$0xff]
      %v288 = vld [vmem:[%s236 + $0x110] sm:$0xff]
      %v289 = vld [vmem:[%s236 + $0x118] sm:$0xff]
      %v290 = vld [vmem:[%s236 + $0x120] sm:$0xff]
      %v291 = vld [vmem:[%s236 + $0x128] sm:$0xff]
      %v292 = vld [vmem:[%s236 + $0x130] sm:$0xff]
      %v293 = vld [vmem:[%s236 + $0x138] sm:$0xff]
      %v294 = vld [vmem:[%s236 + $0x140] sm:$0xff]
      %v295 = vld [vmem:[%s236 + $0x148] sm:$0xff]
      %v296 = vld [vmem:[%s236 + $0x150] sm:$0xff]
      %v297 = vld [vmem:[%s236 + $0x158] sm:$0xff]
      %v298 = vld [vmem:[%s236 + $0x160] sm:$0xff]
      %v299 = vld [vmem:[%s236 + $0x168] sm:$0xff]
      %v300 = vld [vmem:[%s236 + $0x170] sm:$0xff]
      %v301 = vld [vmem:[%s236 + $0x178] sm:$0xff]
      %v302 = vld [vmem:[%s236 + $0x180] sm:$0xff]
      %v303 = vld [vmem:[%s236 + $0x188] sm:$0xff]
      %v304 = vld [vmem:[%s236 + $0x190] sm:$0xff]
      %v305 = vld [vmem:[%s236 + $0x198] sm:$0xff]
      %v306 = vld [vmem:[%s236 + $0x1a0] sm:$0xff]
      %v307 = vld [vmem:[%s236 + $0x1a8] sm:$0xff]
      %v308 = vld [vmem:[%s236 + $0x1b0] sm:$0xff]
      %v309 = vld [vmem:[%s236 + $0x1b8] sm:$0xff]
      %v310 = vld [vmem:[%s236 + $0x1c0] sm:$0xff]
      %v311 = vld [vmem:[%s236 + $0x1c8] sm:$0xff]
      %v312 = vld [vmem:[%s236 + $0x1d0] sm:$0xff]
      %v313 = vld [vmem:[%s236 + $0x1d8] sm:$0xff]
      %v314 = vld [vmem:[%s236 + $0x1e0] sm:$0xff]
      %v315 = vld [vmem:[%s236 + $0x1e8] sm:$0xff]
      %v316 = vld [vmem:[%s236 + $0x1f0] sm:$0xff]
      %v317 = vld [vmem:[%s236 + $0x1f8] sm:$0xff]
      %v318 = vld [vmem:[%s240] sm:$0xf]
      %v320 = vperm.slane %v318, 0
      %v321 = vperm.slane %v318, 1
      %v322 = vperm.slane %v318, 2
      %v323 = vperm.slane %v318, 3
      %v330 = vunpack.c.l.b16 %v252
      %v331 = vunpack.c.h.b16 %v252
      %v332 = vunpack.c.l.b16 %v253
      %v333 = vunpack.c.h.b16 %v253
      %v334 = vpack.c.b16 %v332, %v330
      %v335 = vpack.c.b16 %v333, %v331
      %v402 = vunpack.c.l.b16 %v254
      %v403 = vunpack.c.h.b16 %v254
      %v404 = vunpack.c.l.b16 %v255
      %v405 = vunpack.c.h.b16 %v255
      %v406 = vunpack.c.l.b16 %v256
      %v407 = vunpack.c.h.b16 %v256
      %v408 = vunpack.c.l.b16 %v257
      %v409 = vunpack.c.h.b16 %v257
      %v410 = vunpack.c.l.b16 %v258
      %v411 = vunpack.c.h.b16 %v258
      %v412 = vunpack.c.l.b16 %v259
      %v413 = vunpack.c.h.b16 %v259
      %v414 = vunpack.c.l.b16 %v260
      %v415 = vunpack.c.h.b16 %v260
      %v416 = vunpack.c.l.b16 %v261
      %v417 = vunpack.c.h.b16 %v261
      %v418 = vunpack.c.l.b16 %v262
      %v419 = vunpack.c.h.b16 %v262
      %v420 = vunpack.c.l.b16 %v263
      %v421 = vunpack.c.h.b16 %v263
      %v422 = vunpack.c.l.b16 %v264
      %v423 = vunpack.c.h.b16 %v264
      %v424 = vunpack.c.l.b16 %v265
      %v425 = vunpack.c.h.b16 %v265
      %v426 = vunpack.c.l.b16 %v266
      %v427 = vunpack.c.h.b16 %v266
      %v428 = vunpack.c.l.b16 %v267
      %v429 = vunpack.c.h.b16 %v267
      %v430 = vunpack.c.l.b16 %v268
      %v431 = vunpack.c.h.b16 %v268
      %v432 = vunpack.c.l.b16 %v269
      %v433 = vunpack.c.h.b16 %v269
      %v434 = vunpack.c.l.b16 %v270
      %v435 = vunpack.c.h.b16 %v270
      %v436 = vunpack.c.l.b16 %v271
      %v437 = vunpack.c.h.b16 %v271
      %v438 = vunpack.c.l.b16 %v272
      %v439 = vunpack.c.h.b16 %v272
      %v440 = vunpack.c.l.b16 %v273
      %v441 = vunpack.c.h.b16 %v273
      %v442 = vunpack.c.l.b16 %v274
      %v443 = vunpack.c.h.b16 %v274
      %v444 = vunpack.c.l.b16 %v275
      %v445 = vunpack.c.h.b16 %v275
      %v446 = vunpack.c.l.b16 %v276
      %v447 = vunpack.c.h.b16 %v276
      %v448 = vunpack.c.l.b16 %v277
      %v449 = vunpack.c.h.b16 %v277
      %v450 = vunpack.c.l.b16 %v278
      %v451 = vunpack.c.h.b16 %v278
      %v452 = vunpack.c.l.b16 %v279
      %v453 = vunpack.c.h.b16 %v279
      %v454 = vunpack.c.l.b16 %v280
      %v455 = vunpack.c.h.b16 %v280
      %v456 = vunpack.c.l.b16 %v281
      %v457 = vunpack.c.h.b16 %v281
      %v458 = vunpack.c.l.b16 %v282
      %v459 = vunpack.c.h.b16 %v282
      %v460 = vunpack.c.l.b16 %v283
      %v461 = vunpack.c.h.b16 %v283
      %v462 = vunpack.c.l.b16 %v284
      %v463 = vunpack.c.h.b16 %v284
      %v464 = vunpack.c.l.b16 %v285
      %v465 = vunpack.c.h.b16 %v285
      %v466 = vunpack.c.l.b16 %v286
      %v467 = vunpack.c.h.b16 %v286
      %v468 = vunpack.c.l.b16 %v287
      %v469 = vunpack.c.h.b16 %v287
      %v470 = vunpack.c.l.b16 %v288
      %v471 = vunpack.c.h.b16 %v288
      %v472 = vunpack.c.l.b16 %v289
      %v473 = vunpack.c.h.b16 %v289
      %v474 = vunpack.c.l.b16 %v290
      %v475 = vunpack.c.h.b16 %v290
      %v476 = vunpack.c.l.b16 %v291
      %v477 = vunpack.c.h.b16 %v291
      %v478 = vunpack.c.l.b16 %v292
      %v479 = vunpack.c.h.b16 %v292
      %v480 = vunpack.c.l.b16 %v293
      %v481 = vunpack.c.h.b16 %v293
      %v482 = vunpack.c.l.b16 %v294
      %v483 = vunpack.c.h.b16 %v294
      %v484 = vunpack.c.l.b16 %v295
      %v485 = vunpack.c.h.b16 %v295
      %v486 = vunpack.c.l.b16 %v296
      %v487 = vunpack.c.h.b16 %v296
      %v488 = vunpack.c.l.b16 %v297
      %v489 = vunpack.c.h.b16 %v297
      %v490 = vunpack.c.l.b16 %v298
      %v491 = vunpack.c.h.b16 %v298
      %v492 = vunpack.c.l.b16 %v299
      %v493 = vunpack.c.h.b16 %v299
      %v494 = vunpack.c.l.b16 %v300
      %v495 = vunpack.c.h.b16 %v300
      %v496 = vunpack.c.l.b16 %v301
      %v497 = vunpack.c.h.b16 %v301
      %v498 = vunpack.c.l.b16 %v302
      %v499 = vunpack.c.h.b16 %v302
      %v500 = vunpack.c.l.b16 %v303
      %v501 = vunpack.c.h.b16 %v303
      %v502 = vunpack.c.l.b16 %v304
      %v503 = vunpack.c.h.b16 %v304
      %v504 = vunpack.c.l.b16 %v305
      %v505 = vunpack.c.h.b16 %v305
      %v506 = vunpack.c.l.b16 %v306
      %v507 = vunpack.c.h.b16 %v306
      %v508 = vunpack.c.l.b16 %v307
      %v509 = vunpack.c.h.b16 %v307
      %v510 = vunpack.c.l.b16 %v308
      %v511 = vunpack.c.h.b16 %v308
      %v512 = vunpack.c.l.b16 %v309
      %v513 = vunpack.c.h.b16 %v309
      %v514 = vunpack.c.l.b16 %v310
      %v515 = vunpack.c.h.b16 %v310
      %v516 = vunpack.c.l.b16 %v311
      %v517 = vunpack.c.h.b16 %v311
      %v518 = vunpack.c.l.b16 %v312
      %v519 = vunpack.c.h.b16 %v312
      %v520 = vunpack.c.l.b16 %v313
      %v521 = vunpack.c.h.b16 %v313
      %v522 = vunpack.c.l.b16 %v314
      %v523 = vunpack.c.h.b16 %v314
      %v524 = vunpack.c.l.b16 %v315
      %v525 = vunpack.c.h.b16 %v315
      %v526 = vunpack.c.l.b16 %v316
      %v527 = vunpack.c.h.b16 %v316
      %v528 = vunpack.c.l.b16 %v317
      %v529 = vunpack.c.h.b16 %v317
      %v530 = vpack.c.b16 %v406, %v402
      %v531 = vpack.c.b16 %v407, %v403
      %v532 = vpack.c.b16 %v408, %v404
      %v533 = vpack.c.b16 %v409, %v405
      %v534 = vpack.c.b16 %v414, %v410
      %v535 = vpack.c.b16 %v415, %v411
      %v536 = vpack.c.b16 %v416, %v412
      %v537 = vpack.c.b16 %v417, %v413
      %v538 = vpack.c.b16 %v422, %v418
      %v539 = vpack.c.b16 %v423, %v419
      %v540 = vpack.c.b16 %v424, %v420
      %v541 = vpack.c.b16 %v425, %v421
      %v542 = vpack.c.b16 %v430, %v426
      %v543 = vpack.c.b16 %v431, %v427
      %v544 = vpack.c.b16 %v432, %v428
      %v545 = vpack.c.b16 %v433, %v429
      %v546 = vpack.c.b16 %v438, %v434
      %v547 = vpack.c.b16 %v439, %v435
      %v548 = vpack.c.b16 %v440, %v436
      %v549 = vpack.c.b16 %v441, %v437
      %v550 = vpack.c.b16 %v446, %v442
      %v551 = vpack.c.b16 %v447, %v443
      %v552 = vpack.c.b16 %v448, %v444
      %v553 = vpack.c.b16 %v449, %v445
      %v554 = vpack.c.b16 %v454, %v450
      %v555 = vpack.c.b16 %v455, %v451
      %v556 = vpack.c.b16 %v456, %v452
      %v557 = vpack.c.b16 %v457, %v453
      %v558 = vpack.c.b16 %v462, %v458
      %v559 = vpack.c.b16 %v463, %v459
      %v560 = vpack.c.b16 %v464, %v460
      %v561 = vpack.c.b16 %v465, %v461
      %v562 = vpack.c.b16 %v470, %v466
      %v563 = vpack.c.b16 %v471, %v467
      %v564 = vpack.c.b16 %v472, %v468
      %v565 = vpack.c.b16 %v473, %v469
      %v566 = vpack.c.b16 %v478, %v474
      %v567 = vpack.c.b16 %v479, %v475
      %v568 = vpack.c.b16 %v480, %v476
      %v569 = vpack.c.b16 %v481, %v477
      %v570 = vpack.c.b16 %v486, %v482
      %v571 = vpack.c.b16 %v487, %v483
      %v572 = vpack.c.b16 %v488, %v484
      %v573 = vpack.c.b16 %v489, %v485
      %v574 = vpack.c.b16 %v494, %v490
      %v575 = vpack.c.b16 %v495, %v491
      %v576 = vpack.c.b16 %v496, %v492
      %v577 = vpack.c.b16 %v497, %v493
      %v578 = vpack.c.b16 %v502, %v498
      %v579 = vpack.c.b16 %v503, %v499
      %v580 = vpack.c.b16 %v504, %v500
      %v581 = vpack.c.b16 %v505, %v501
      %v582 = vpack.c.b16 %v510, %v506
      %v583 = vpack.c.b16 %v511, %v507
      %v584 = vpack.c.b16 %v512, %v508
      %v585 = vpack.c.b16 %v513, %v509
      %v586 = vpack.c.b16 %v518, %v514
      %v587 = vpack.c.b16 %v519, %v515
      %v588 = vpack.c.b16 %v520, %v516
      %v589 = vpack.c.b16 %v521, %v517
      %v590 = vpack.c.b16 %v526, %v522
      %v591 = vpack.c.b16 %v527, %v523
      %v592 = vpack.c.b16 %v528, %v524
      %v593 = vpack.c.b16 %v529, %v525
      %658 = vmatpush.bf16.msra.mxu0 %v558
      %659 = vmatpush.bf16.msra.mxu0 %v554
      %660 = vmatpush.bf16.msra.mxu0 %v550
      %661 = vmatpush.bf16.msra.mxu0 %v546
      %662 = vmatpush.bf16.msra.mxu0 %v542
      %663 = vmatpush.bf16.msra.mxu0 %v538
      %664 = vmatpush.bf16.msra.mxu0 %v534
      %665 = vmatpush.bf16.msra.mxu0 %v530
      %666 = vmatmul.bf16.gmra.mxu0 %v334
      %v667 = vpop.f32.mrf.mxu0
      %v668 = vadd.f32 %v320, %v667
      %v669 = vpop.f32.mrf.mxu0
      %v670 = vadd.f32 %v320, %v669
      %671 = vdwg.mxu0
      %672 = vmatpush.bf16.msra.mxu0 %v590
      %673 = vmatpush.bf16.msra.mxu0 %v586
      %674 = vmatpush.bf16.msra.mxu0 %v582
      %675 = vmatpush.bf16.msra.mxu0 %v578
      %676 = vmatpush.bf16.msra.mxu0 %v574
      %677 = vmatpush.bf16.msra.mxu0 %v570
      %678 = vmatpush.bf16.msra.mxu0 %v566
      %679 = vmatpush.bf16.msra.mxu0 %v562
      %680 = vmatmul.bf16.gmra.mxu0 %v335
      %v681 = vpop.f32.mrf.mxu0
      %v682 = vadd.f32 %v668, %v681
      %v683 = vpop.f32.mrf.mxu0
      %v684 = vadd.f32 %v670, %v683
      %685 = vdwg.mxu0
      %686 = vmatpush.bf16.msra.mxu0 %v559
      %687 = vmatpush.bf16.msra.mxu0 %v555
      %688 = vmatpush.bf16.msra.mxu0 %v551
      %689 = vmatpush.bf16.msra.mxu0 %v547
      %690 = vmatpush.bf16.msra.mxu0 %v543
      %691 = vmatpush.bf16.msra.mxu0 %v539
      %692 = vmatpush.bf16.msra.mxu0 %v535
      %693 = vmatpush.bf16.msra.mxu0 %v531
      %694 = vmatmul.bf16.gmra.mxu0 %v334
      %v695 = vpop.f32.mrf.mxu0
      %v696 = vadd.f32 %v321, %v695
      %v697 = vpop.f32.mrf.mxu0
      %v698 = vadd.f32 %v321, %v697
      %699 = vdwg.mxu0
      %700 = vmatpush.bf16.msra.mxu0 %v591
      %701 = vmatpush.bf16.msra.mxu0 %v587
      %702 = vmatpush.bf16.msra.mxu0 %v583
      %703 = vmatpush.bf16.msra.mxu0 %v579
      %704 = vmatpush.bf16.msra.mxu0 %v575
      %705 = vmatpush.bf16.msra.mxu0 %v571
      %706 = vmatpush.bf16.msra.mxu0 %v567
      %707 = vmatpush.bf16.msra.mxu0 %v563
      %708 = vmatmul.bf16.gmra.mxu0 %v335
      %v709 = vpop.f32.mrf.mxu0
      %v710 = vadd.f32 %v696, %v709
      %v711 = vpop.f32.mrf.mxu0
      %v712 = vadd.f32 %v698, %v711
      %713 = vdwg.mxu0
      %714 = vmatpush.bf16.msra.mxu0 %v560
      %715 = vmatpush.bf16.msra.mxu0 %v556
      %716 = vmatpush.bf16.msra.mxu0 %v552
      %717 = vmatpush.bf16.msra.mxu0 %v548
      %718 = vmatpush.bf16.msra.mxu0 %v544
      %719 = vmatpush.bf16.msra.mxu0 %v540
      %720 = vmatpush.bf16.msra.mxu0 %v536
      %721 = vmatpush.bf16.msra.mxu0 %v532
      %722 = vmatmul.bf16.gmra.mxu0 %v334
      %v723 = vpop.f32.mrf.mxu0
      %v724 = vadd.f32 %v322, %v723
      %v725 = vpop.f32.mrf.mxu0
      %v726 = vadd.f32 %v322, %v725
      %727 = vdwg.mxu0
      %728 = vmatpush.bf16.msra.mxu0 %v592
      %729 = vmatpush.bf16.msra.mxu0 %v588
      %730 = vmatpush.bf16.msra.mxu0 %v584
      %731 = vmatpush.bf16.msra.mxu0 %v580
      %732 = vmatpush.bf16.msra.mxu0 %v576
      %733 = vmatpush.bf16.msra.mxu0 %v572
      %734 = vmatpush.bf16.msra.mxu0 %v568
      %735 = vmatpush.bf16.msra.mxu0 %v564
      %736 = vmatmul.bf16.gmra.mxu0 %v335
      %v737 = vpop.f32.mrf.mxu0
      %v738 = vadd.f32 %v724, %v737
      %v739 = vpop.f32.mrf.mxu0
      %v740 = vadd.f32 %v726, %v739
      %741 = vdwg.mxu0
      %742 = vmatpush.bf16.msra.mxu0 %v561
      %743 = vmatpush.bf16.msra.mxu0 %v557
      %744 = vmatpush.bf16.msra.mxu0 %v553
      %745 = vmatpush.bf16.msra.mxu0 %v549
      %746 = vmatpush.bf16.msra.mxu0 %v545
      %747 = vmatpush.bf16.msra.mxu0 %v541
      %748 = vmatpush.bf16.msra.mxu0 %v537
      %749 = vmatpush.bf16.msra.mxu0 %v533
      %750 = vmatmul.bf16.gmra.mxu0 %v334
      %v751 = vpop.f32.mrf.mxu0
      %v752 = vadd.f32 %v323, %v751
      %v753 = vpop.f32.mrf.mxu0
      %v754 = vadd.f32 %v323, %v753
      %755 = vdwg.mxu0
      %756 = vmatpush.bf16.msra.mxu0 %v593
      %757 = vmatpush.bf16.msra.mxu0 %v589
      %758 = vmatpush.bf16.msra.mxu0 %v585
      %759 = vmatpush.bf16.msra.mxu0 %v581
      %760 = vmatpush.bf16.msra.mxu0 %v577
      %761 = vmatpush.bf16.msra.mxu0 %v573
      %762 = vmatpush.bf16.msra.mxu0 %v569
      %763 = vmatpush.bf16.msra.mxu0 %v565
      %764 = vmatmul.bf16.gmra.mxu0 %v335
      %v765 = vpop.f32.mrf.mxu0
      %v766 = vadd.f32 %v752, %v765
      %v767 = vpop.f32.mrf.mxu0
      %v768 = vadd.f32 %v754, %v767
      %769 = vdwg.mxu0
      %770 = vst [vmem:[%s250] sm:$0xff] %v682
      %771 = vst [vmem:[%s250 + $0x8] sm:$0xff] %v710
      %772 = vst [vmem:[%s250 + $0x10] sm:$0xff] %v738
      %773 = vst [vmem:[%s250 + $0x18] sm:$0xff] %v766
      %774 = vst [vmem:[%s250 + $0x20] sm:$0xff] %v684
      %775 = vst [vmem:[%s250 + $0x28] sm:$0xff] %v712
      %776 = vst [vmem:[%s250 + $0x30] sm:$0xff] %v740
      %777 = vst [vmem:[%s250 + $0x38] sm:$0xff] %v768
      %s778 = smul.u32 2, %s19
      %p779 = scmp.lt.s32.totalorder %s18, 1
      %s780 = scalar_select %p779, %s18, 1
      %p781 = scmp.lt.s32.totalorder %s778, 1
      %s782 = scalar_select %p781, %s778, 1
      %s783 = smul.addr %s782, 4
      %s784 = smul.addr %s780, 8
      %s785 = sadd.s32 %s783, %s784
      %s786 = smul.addr %s785, 8
      %s787 = scalar_lea.vmem %s3, %s786
      // Predicated region
      $region33: #{rnd_forward.5} parent=31 // pred_check
        %p788 = pneg %p126
      $region34: #{rnd_forward.5} parent=31 // pred_check_branch
        %790 = sbr.rel (%p788) target = $region36
      $region35: #{rnd_forward.5} parent=31 // pred_region
        %s791 = smul.u32 2, %s19
      $region36: #{rnd_forward.5} parent=31 // pred_fallthru
        _
    $region32: #{rnd_forward.5} parent=5 // pred_fallthru
      _
    %p792 = scmp.le.s32.totalorder 2, %s9
    // Predicated region
    $region37: #{rnd_forward.5} parent=5 // pred_check
      %p793 = pneg %p792
    $region38: #{rnd_forward.5} parent=5 // pred_check_branch
      %795 = sbr.rel (%p793) target = $region40
    $region39: #{rnd_forward.5} parent=5 // pred_region
      %s796 = ssub.s32 %s9, 2
      // Predicated region
      $region41: #{rnd_forward.5} parent=39 // pred_check
        %p797 = pneg %p132
      $region42: #{rnd_forward.5} parent=39 // pred_check_branch
        %799 = sbr.rel (%p797) target = $region44
      $region43: #{rnd_forward.5} parent=39 // pred_region
        %s800 = smul.u32 2, %s21
        %p801 = scmp.lt.s32.totalorder %s20, 1
        %s802 = scalar_select %p801, %s20, 1
        %p803 = scmp.lt.s32.totalorder %s800, 1
        %s804 = scalar_select %p803, %s800, 1
        %s805 = smul.addr %s804, 4
        %s806 = smul.addr %s802, 8
        %s807 = sadd.s32 %s805, %s806
        %s808 = smul.addr %s807, 8
        %s809 = scalar_lea.vmem %s3, %s808
      $region44: #{rnd_forward.5} parent=39 // pred_fallthru
        _
    $region40: #{rnd_forward.5} parent=5 // pred_fallthru
      _
  $region6: #{rnd_forward.5} parent=0 // loop_footer
    %s13 = sadd.s32 1, %s9
  $region7: #{rnd_forward.5} parent=0 // loop_footer_branch
    %8 = sbr.rel target = $region3
  $region8: #{rnd_forward.5} parent=0 // loop_exit
    _

</llo_original>
